<compile_context>
chip_gen: v5e
topology: v5e:2x2
jax: 0.10.0
libtpu: 0.0.40
codegen_flags: <defaults>
</compile_context>

<pallas_src>
import functools

import jax
import jax.numpy as jnp
import numpy as np
from jax import lax
from jax.experimental import pallas as pl
from jax.experimental.pallas import tpu as pltpu

MIN_NORM = 1e-15     # PoincareBall.min_norm
BALL_EPS = 4e-3      # PoincareBall.proj float32 boundary eps
NEG_SLOPE = 0.2      # HypergraphConv leaky-relu negative slope
MASK_NEG = -1e30     # additive mask for non-incident (node, hyperedge) pairs


# ----------------------------------------------------------------------------
# small helpers
# ----------------------------------------------------------------------------
def _round_up(n, m):
    return ((n + m - 1) // m) * m


def _pick_block(n, max_block=512):
    # large node tiles (multiple of 8 sublanes) to amortise per-grid-step cost
    return min(max_block, _round_up(max(n, 8), 8))


def _pad_rows(a, rows):
    pad = rows - a.shape[0]
    if pad <= 0:
        return a
    return jnp.pad(a, ((0, pad),) + ((0, 0),) * (a.ndim - 1))


def _mxu_dot(a, b):          # a @ b, bf16 MXU operands, f32 accumulation
    return jnp.dot(a.astype(jnp.bfloat16), b.astype(jnp.bfloat16),
                   preferred_element_type=jnp.float32)


def _mxu_tdot(a, b):         # a^T @ b (contract rows) without materializing a^T
    return lax.dot_general(a.astype(jnp.bfloat16), b.astype(jnp.bfloat16),
                           (((0,), (0,)), ((), ())),
                           preferred_element_type=jnp.float32)


def _mxu_dot_t(a, b):        # a @ b^T (contract last dims)
    return lax.dot_general(a.astype(jnp.bfloat16), b.astype(jnp.bfloat16),
                           (((1,), (1,)), ((), ())),
                           preferred_element_type=jnp.float32)


# ----------------------------------------------------------------------------
# Kernel 1: Poincare logmap0, tiled over node blocks.
# ----------------------------------------------------------------------------
def _logmap0_kernel(x_ref, o_ref, *, c):
    x = x_ref[...]
    sqrt_c = c ** 0.5
    norm = jnp.maximum(jnp.sqrt(jnp.sum(x * x, axis=-1, keepdims=True)), MIN_NORM)
    z = jnp.clip(sqrt_c * norm, -1.0 + 1e-7, 1.0 - 1e-7)
    artanh = 0.5 * jnp.log((1.0 + z) / (1.0 - z))
    o_ref[...] = (artanh / (sqrt_c * norm)) * x


def poincare_logmap0(x, c, block_n):
    N, F = x.shape                               # N is padded to a multiple of block_n
    return pl.pallas_call(
        functools.partial(_logmap0_kernel, c=c),
        out_shape=jax.ShapeDtypeStruct((N, F), jnp.float32),
        grid=(N // block_n,),
        in_specs=[pl.BlockSpec((block_n, F), lambda i: (i, 0))],
        out_specs=pl.BlockSpec((block_n, F), lambda i: (i, 0)),
        compiler_params=pltpu.CompilerParams(dimension_semantics=("parallel",)),
    )(x)


# ----------------------------------------------------------------------------
# Shared in-kernel attention helper (per head, per node block).
# ----------------------------------------------------------------------------
def _head_alpha(xw, att_src, se_rows, mask_bias, row_valid, h, fo):
    xh = xw[:, h * fo:(h + 1) * fo]                         # [bn, Fo]
    a_src = att_src[h:h + 1, :]                             # [1, Fo]
    s_n = jnp.sum(xh * a_src, axis=-1, keepdims=True)       # [bn, 1]  (VPU/XLU reduce)
    s_e = se_rows[h:h + 1, :]                               # [1, E]
    score = s_n + s_e                                       # [bn, E]
    score = jnp.where(score > 0, score, NEG_SLOPE * score)  # leaky relu
    score = score + mask_bias                               # additive -1e30 mask
    m = jnp.max(score, axis=-1, keepdims=True)              # per-node softmax
    p = jnp.exp(score - m)
    den = jnp.sum(p, axis=-1, keepdims=True)
    # row_valid zeroes out nodes with no incident hyperedge (den is >= 1 otherwise)
    alpha = p * (row_valid * pl.reciprocal(den, approx=True))
    return xh, alpha


# ----------------------------------------------------------------------------
# Kernel 2a: node projection xw = x @ W (per block) and hyperedge projection /
#            attention scores (reduction of H^T x over node blocks).
# ----------------------------------------------------------------------------
def _conv_edge_proj_kernel(x_ref, h_ref, w_ref, attd_ref, einv_ref,
                           xw_ref, se_ref, eacc_ref):
    i = pl.program_id(0)

    @pl.when(i == 0)
    def _():
        eacc_ref[...] = jnp.zeros_like(eacc_ref)

    x = x_ref[...]
    w = w_ref[...]
    xw_ref[...] = _mxu_dot(x, w)                 # [bn, heads*Fo]
    eacc_ref[...] += _mxu_tdot(h_ref[...], x)    # accumulate H^T x over node blocks

    @pl.when(i == pl.num_programs(0) - 1)
    def _():
        e_attr = eacc_ref[...] * einv_ref[...]   # degree-normalised hyperedge feats
        ew = _mxu_dot(e_attr, w)                 # [E, heads*Fo]
        # one block-diagonal matmul gives all heads' edge attention scores
        se_ref[...] = _mxu_dot_t(attd_ref[...], ew)   # [heads, E]


# ----------------------------------------------------------------------------
# Kernel 2b: edge_feat[e, h] = e_inv[e] * sum_n alpha_h[n, e] * xw_h[n]
#            (reduction over node blocks).
# ----------------------------------------------------------------------------
def _conv_edge_feat_kernel(xw_ref, mb_ref, rv_ref, attsrc_ref, se_ref, einv_ref,
                           ef_ref, efacc_ref, *, heads, fo):
    i = pl.program_id(0)

    @pl.when(i == 0)
    def _():
        efacc_ref[...] = jnp.zeros_like(efacc_ref)

    xw = xw_ref[...]
    mb = mb_ref[...]
    rv = rv_ref[...]
    att_src = attsrc_ref[...]
    se = se_ref[...]
    parts = []
    for h in range(heads):                       # heads is small and static
        xh, alpha = _head_alpha(xw, att_src, se, mb, rv, h, fo)
        parts.append(_mxu_tdot(alpha, xh))       # [E, Fo]
    efacc_ref[...] += jnp.concatenate(parts, axis=-1)    # lane-dense accumulate

    @pl.when(i == pl.num_programs(0) - 1)
    def _():
        ef_ref[...] = efacc_ref[...] * einv_ref[...]     # scale rows by 1/|e|


# ----------------------------------------------------------------------------
# Kernel 2c: node output  out[n] = (1/heads) * D_n^-1 * sum_h alpha_h @ ef_h + bias
#            (parallel over node blocks -> megacore shards it).
# ----------------------------------------------------------------------------
def _conv_node_out_kernel(xw_ref, mb_ref, rv_ref, ns_ref, attsrc_ref, se_ref,
                          ef_ref, bias_ref, o_ref, *, heads, fo):
    xw = xw_ref[...]
    mb = mb_ref[...]
    rv = rv_ref[...]
    att_src = attsrc_ref[...]
    se = se_ref[...]
    ef = ef_ref[...]
    acc = jnp.zeros((xw.shape[0], fo), jnp.float32)
    for h in range(heads):
        _, alpha = _head_alpha(xw, att_src, se, mb, rv, h, fo)
        acc = acc + _mxu_dot(alpha, ef[:, h * fo:(h + 1) * fo])
    # ns_ref already folds the 1/heads head-average; bias added once.
    o_ref[...] = acc * ns_ref[...] + bias_ref[...]


def hypergraph_conv(x, H, W, att_src, att_dst_blk, bias_row,
                    e_inv_col, n_scale, row_valid, mask_bias, *, heads, bn):
    N, Fin = x.shape                   # N already padded to a multiple of bn
    E = H.shape[1]
    HF = W.shape[1]
    fo = HF // heads
    grid = (N // bn,)

    w16 = W.astype(jnp.bfloat16)
    attd16 = att_dst_blk.astype(jnp.bfloat16)

    # --- phase A ---------------------------------------------------------
    xw, se = pl.pallas_call(
        _conv_edge_proj_kernel,
        out_shape=(jax.ShapeDtypeStruct((N, HF), jnp.float32),
                   jax.ShapeDtypeStruct((heads, E), jnp.float32)),
        grid=grid,
        in_specs=[
            pl.BlockSpec((bn, Fin), lambda i: (i, 0)),     # x
            pl.BlockSpec((bn, E), lambda i: (i, 0)),       # H
            pl.BlockSpec((Fin, HF), lambda i: (0, 0)),     # W (bf16, resident)
            pl.BlockSpec((heads, HF), lambda i: (0, 0)),   # block-diag att_dst (bf16)
            pl.BlockSpec((E, 1), lambda i: (0, 0)),        # 1/edge-degree
        ],
        out_specs=(pl.BlockSpec((bn, HF), lambda i: (i, 0)),
                   pl.BlockSpec((heads, E), lambda i: (0, 0))),
        scratch_shapes=[pltpu.VMEM((E, Fin), jnp.float32)],
        compiler_params=pltpu.CompilerParams(dimension_semantics=("arbitrary",)),
    )(x, H, w16, attd16, e_inv_col)

    # --- phase B ---------------------------------------------------------
    ef = pl.pallas_call(
        functools.partial(_conv_edge_feat_kernel, heads=heads, fo=fo),
        out_shape=jax.ShapeDtypeStruct((E, HF), jnp.float32),
        grid=grid,
        in_specs=[
            pl.BlockSpec((bn, HF), lambda i: (i, 0)),      # xw
            pl.BlockSpec((bn, E), lambda i: (i, 0)),       # additive mask
            pl.BlockSpec((bn, 1), lambda i: (i, 0)),       # row_valid
            pl.BlockSpec((heads, fo), lambda i: (0, 0)),   # att_src
            pl.BlockSpec((heads, E), lambda i: (0, 0)),    # edge attention scores
            pl.BlockSpec((E, 1), lambda i: (0, 0)),        # 1/edge-degree
        ],
        out_specs=pl.BlockSpec((E, HF), lambda i: (0, 0)),
        scratch_shapes=[pltpu.VMEM((E, HF), jnp.float32)],
        compiler_params=pltpu.CompilerParams(dimension_semantics=("arbitrary",)),
    )(xw, mask_bias, row_valid, att_src, se, e_inv_col)

    # --- phase C ---------------------------------------------------------
    out = pl.pallas_call(
        functools.partial(_conv_node_out_kernel, heads=heads, fo=fo),
        out_shape=jax.ShapeDtypeStruct((N, fo), jnp.float32),
        grid=grid,
        in_specs=[
            pl.BlockSpec((bn, HF), lambda i: (i, 0)),      # xw
            pl.BlockSpec((bn, E), lambda i: (i, 0)),       # additive mask
            pl.BlockSpec((bn, 1), lambda i: (i, 0)),       # row_valid
            pl.BlockSpec((bn, 1), lambda i: (i, 0)),       # (1/node-degree)/heads
            pl.BlockSpec((heads, fo), lambda i: (0, 0)),   # att_src
            pl.BlockSpec((heads, E), lambda i: (0, 0)),    # edge attention scores
            pl.BlockSpec((E, HF), lambda i: (0, 0)),       # edge_feat
            pl.BlockSpec((1, fo), lambda i: (0, 0)),       # bias
        ],
        out_specs=pl.BlockSpec((bn, fo), lambda i: (i, 0)),
        compiler_params=pltpu.CompilerParams(dimension_semantics=("parallel",)),
    )(xw, mask_bias, row_valid, n_scale, att_src, se, ef, bias_row)
    return out


# ----------------------------------------------------------------------------
# Kernel 3: sum of the (L+1) branches (no jnp.stack), mean, expmap0 + proj.
# ----------------------------------------------------------------------------
def _sum_exp_proj_kernel(*refs, c, inv_count):
    o_ref = refs[-1]
    u = refs[0][...]
    for r in refs[1:-1]:
        u = u + r[...]
    u = u * inv_count
    sqrt_c = c ** 0.5
    u_norm = jnp.maximum(jnp.sqrt(jnp.sum(u * u, axis=-1, keepdims=True)), MIN_NORM)
    gamma = jnp.tanh(sqrt_c * u_norm) * u / (sqrt_c * u_norm)          # expmap0
    g_norm = jnp.maximum(jnp.sqrt(jnp.sum(gamma * gamma, axis=-1, keepdims=True)),
                         MIN_NORM)
    maxnorm = (1.0 - BALL_EPS) / sqrt_c
    o_ref[...] = jnp.where(g_norm > maxnorm, gamma / g_norm * maxnorm, gamma)  # proj


def sum_expmap0_proj(branches, c, block_n):
    N, F = branches[0].shape
    k = len(branches)
    return pl.pallas_call(
        functools.partial(_sum_exp_proj_kernel, c=c, inv_count=1.0 / k),
        out_shape=jax.ShapeDtypeStruct((N, F), jnp.float32),
        grid=(N // block_n,),
        in_specs=[pl.BlockSpec((block_n, F), lambda i: (i, 0)) for _ in range(k)],
        out_specs=pl.BlockSpec((block_n, F), lambda i: (i, 0)),
        compiler_params=pltpu.CompilerParams(dimension_semantics=("parallel",)),
    )(*branches)


# ----------------------------------------------------------------------------
# H2GraphConvolution forward (== H2Agg.forward, eval mode)
# ----------------------------------------------------------------------------
def h2_graph_convolution_forward(x, H, params, *, c, heads):
    N, F = x.shape
    E = H.shape[1]
    bn = _pick_block(N)
    Np = _round_up(N, bn)                       # pad rows instead of dropping them
    xp = _pad_rows(x.astype(jnp.float32), Np)
    Hp = _pad_rows(H.astype(jnp.float32), Np)   # padded nodes have zero degree

    # Degree / mask terms depend only on H -> compute once, shared by all layers.
    e_deg = jnp.sum(Hp, axis=0)
    n_deg = jnp.sum(Hp, axis=1, keepdims=True)
    e_inv_col = jnp.where(e_deg > 0, 1.0 / e_deg, 0.0).reshape(E, 1)
    n_scale = jnp.where(n_deg > 0, 1.0 / n_deg, 0.0) / heads        # [Np, 1]
    row_valid = (n_deg > 0).astype(jnp.float32)                     # [Np, 1]
    mask_bias = jnp.where(Hp > 0, 0.0, MASK_NEG).astype(jnp.float32)  # [Np, E]

    outs = [poincare_logmap0(xp, c, bn)]
    for (W, att, b) in params:
        fo = W.shape[1] // heads
        att_src = att[:, :fo]                                       # [heads, Fo]
        att_dst_blk = jax.scipy.linalg.block_diag(                  # [heads, heads*Fo]
            *[att[h:h + 1, fo:] for h in range(heads)])
        outs.append(hypergraph_conv(
            outs[-1], Hp, W, att_src, att_dst_blk, b.reshape(1, fo),
            e_inv_col, n_scale, row_valid, mask_bias, heads=heads, bn=bn))

    out = sum_expmap0_proj(outs, c, bn)
    return out[:N]


# ----------------------------------------------------------------------------
# Pure-JAX reference (f32, HIGHEST matmul precision) for a sanity check.
# ----------------------------------------------------------------------------
def ref_forward(x, H, params, c, heads):
    P = jax.lax.Precision.HIGHEST
    sqrt_c = c ** 0.5

    def logmap0(p):
        n = jnp.maximum(jnp.linalg.norm(p, axis=-1, keepdims=True), MIN_NORM)
        z = jnp.clip(sqrt_c * n, -1 + 1e-7, 1 - 1e-7)
        return 0.5 * jnp.log((1 + z) / (1 - z)) / (sqrt_c * n) * p

    def expmap0(u):
        n = jnp.maximum(jnp.linalg.norm(u, axis=-1, keepdims=True), MIN_NORM)
        return jnp.tanh(sqrt_c * n) * u / (sqrt_c * n)

    def proj(p):
        n = jnp.maximum(jnp.linalg.norm(p, axis=-1, keepdims=True), MIN_NORM)
        maxnorm = (1 - BALL_EPS) / sqrt_c
        return jnp.where(n > maxnorm, p / n * maxnorm, p)

    def conv(xin, W, att, b):
        N, E = H.shape
        Fo = W.shape[1] // heads
        xw = jnp.dot(xin, W, precision=P)
        e_deg = H.sum(0)
        n_deg = H.sum(1)
        e_inv = jnp.where(e_deg > 0, 1.0 / e_deg, 0.0)
        n_inv = jnp.where(n_deg > 0, 1.0 / n_deg, 0.0)
        e_attr = jnp.dot(H.T * e_inv[:, None], xin, precision=P)
        ew = jnp.dot(e_attr, W, precision=P)
        mask = H > 0
        acc = jnp.zeros((N, Fo), jnp.float32)
        for h in range(heads):
            xh = xw[:, h * Fo:(h + 1) * Fo]
            eh = ew[:, h * Fo:(h + 1) * Fo]
            s_n = (xh * att[h, :Fo]).sum(-1)[:, None]
            s_e = (eh * att[h, Fo:]).sum(-1)[None, :]
            sc = s_n + s_e
            sc = jnp.where(sc > 0, sc, NEG_SLOPE * sc)
            sc = jnp.where(mask, sc, -1e30)
            m = sc.max(-1, keepdims=True)
            pm = jnp.where(mask, jnp.exp(sc - m), 0.0)
            den = pm.sum(-1, keepdims=True)
            alpha = pm * jnp.where(den > 0, 1.0 / den, 0.0)
            ef = jnp.dot((alpha * e_inv[None, :]).T, xh, precision=P)
            acc = acc + jnp.dot(alpha, ef, precision=P) * n_inv[:, None]
        return acc / heads + b[None, :]

    outs = [logmap0(x)]
    for (W, att, b) in params:
        outs.append(conv(outs[-1], W, att, b))
    avg = sum(outs) / (len(params) + 1)
    return proj(expmap0(avg))


# ----------------------------------------------------------------------------
if __name__ == "__main__":
    N, E, F = 20, 8, 32          # N deliberately not a multiple of 8 (padding path)
    HEADS = 2
    NUM_LAYERS = 2
    C = 1.0

    key = jax.random.PRNGKey(0)
    k_x, k_h, *k_p = jax.random.split(key, 2 + 3 * NUM_LAYERS)

    # points inside the Poincare ball
    x = (0.05 * jax.random.normal(k_x, (N, F))).astype(jnp.float32)
    # dense hypergraph incidence matrix
    H = jax.random.bernoulli(k_h, 0.4, (N, E)).astype(jnp.float32)

    params = []
    for l in range(NUM_LAYERS):
        kw, ka, kb = k_p[3 * l], k_p[3 * l + 1], k_p[3 * l + 2]
        W = (jax.random.normal(kw, (F, HEADS * F)) / np.sqrt(F)).astype(jnp.float32)
        att = (0.1 * jax.random.normal(ka, (HEADS, 2 * F))).astype(jnp.float32)
        b = (0.01 * jax.random.normal(kb, (F,))).astype(jnp.float32)
        params.append((W, att, b))

    fwd = jax.jit(functools.partial(h2_graph_convolution_forward, c=C, heads=HEADS))
    out = jax.block_until_ready(fwd(x, H, params))

    ref = jax.block_until_ready(ref_forward(x, H, params, C, HEADS))
    np.testing.assert_allclose(np.asarray(out), np.asarray(ref),
                               rtol=1e-2, atol=1e-2)
    assert out.shape == (N, F)
    assert np.isfinite(np.asarray(out)).all()
    print("KERNEL_OK")
</pallas_src>

<mosaic_0001>
module attributes {stable_mosaic.version = 11 : i64} {
  func.func @_logmap0_kernel(%arg0: i32, %arg1: memref<24x32xf32, #tpu.memory_space<vmem>>, %arg2: memref<24x32xf32, #tpu.memory_space<vmem>>) attributes {dimension_semantics = [#tpu.dimension_semantics<parallel>], iteration_bounds = array<i64: 1>, scalar_prefetch = 0 : i64, scratch_operands = 0 : i64, tpu.core_type = #tpu.core_type<tc>, window_params = [{transform_indices = @transform_0, window_bounds = array<i64: 24, 32>}, {transform_indices = @transform_1, window_bounds = array<i64: 24, 32>}]} {
    %c0 = arith.constant 0 : index
    %c0_0 = arith.constant 0 : index
    %0 = vector.load %arg1[%c0, %c0_0] : memref<24x32xf32, #tpu.memory_space<vmem>>, vector<24x32xf32>
    %1 = arith.mulf %0, %0 : vector<24x32xf32>
    %cst = arith.constant dense<0.000000e+00> : vector<24xf32>
    %2 = vector.multi_reduction <add>, %1, %cst [1] : vector<24x32xf32> to vector<24xf32>
    %3 = vector.shape_cast %2 : vector<24xf32> to vector<24x1xf32>
    %4 = math.sqrt %3 : vector<24x1xf32>
    %cst_1 = arith.constant 1.000000e-15 : f32
    %5 = vector.broadcast %cst_1 : f32 to vector<24x1xf32>
    %6 = arith.maximumf %4, %5 : vector<24x1xf32>
    %cst_2 = arith.constant 1.000000e+00 : f32
    %7 = vector.broadcast %cst_2 : f32 to vector<24x1xf32>
    %8 = arith.mulf %7, %6 : vector<24x1xf32>
    %cst_3 = arith.constant -0.99999988 : f32
    %cst_4 = arith.constant 0.99999988 : f32
    %9 = vector.broadcast %cst_3 : f32 to vector<24x1xf32>
    %10 = arith.maximumf %9, %8 : vector<24x1xf32>
    %11 = vector.broadcast %cst_4 : f32 to vector<24x1xf32>
    %12 = arith.minimumf %11, %10 : vector<24x1xf32>
    %cst_5 = arith.constant 1.000000e+00 : f32
    %13 = vector.broadcast %cst_5 : f32 to vector<24x1xf32>
    %14 = arith.addf %13, %12 : vector<24x1xf32>
    %cst_6 = arith.constant 1.000000e+00 : f32
    %15 = vector.broadcast %cst_6 : f32 to vector<24x1xf32>
    %16 = arith.subf %15, %12 : vector<24x1xf32>
    %17 = arith.divf %14, %16 : vector<24x1xf32>
    %18 = math.log %17 : vector<24x1xf32>
    %cst_7 = arith.constant 5.000000e-01 : f32
    %19 = vector.broadcast %cst_7 : f32 to vector<24x1xf32>
    %20 = arith.mulf %19, %18 : vector<24x1xf32>
    %cst_8 = arith.constant 1.000000e+00 : f32
    %21 = vector.broadcast %cst_8 : f32 to vector<24x1xf32>
    %22 = arith.mulf %21, %6 : vector<24x1xf32>
    %23 = arith.divf %20, %22 : vector<24x1xf32>
    %24 = vector.broadcast %23 : vector<24x1xf32> to vector<24x32xf32>
    %25 = arith.mulf %24, %0 : vector<24x32xf32>
    %c0_9 = arith.constant 0 : index
    %c0_10 = arith.constant 0 : index
    %26 = vector.load %arg2[%c0_9, %c0_10] : memref<24x32xf32, #tpu.memory_space<vmem>>, vector<24x32xf32>
    tpu.vector_store %arg2[%c0_9, %c0_10], %25 {strides = array<i32>} : memref<24x32xf32, #tpu.memory_space<vmem>>, vector<24x32xf32>,
    return
  }
  func.func @transform_0(%arg0: i32) -> (i32, i32) {
    %c0_i32 = arith.constant 0 : i32
    %c0_i32_0 = arith.constant 0 : i32
    return %arg0, %c0_i32 : i32, i32
  }
  func.func @transform_1(%arg0: i32) -> (i32, i32) {
    %c0_i32 = arith.constant 0 : i32
    %c0_i32_0 = arith.constant 0 : i32
    return %arg0, %c0_i32 : i32, i32
  }
}

module attributes {stable_mosaic.version = 11 : i64} {
  func.func @_conv_edge_proj_kernel(%arg0: i32, %arg1: memref<24x32xf32, #tpu.memory_space<vmem>>, %arg2: memref<24x8xf32, #tpu.memory_space<vmem>>, %arg3: memref<32x64xbf16, #tpu.memory_space<vmem>>, %arg4: memref<2x64xbf16, #tpu.memory_space<vmem>>, %arg5: memref<8x1xf32, #tpu.memory_space<vmem>>, %arg6: memref<24x64xf32, #tpu.memory_space<vmem>>, %arg7: memref<2x8xf32, #tpu.memory_space<vmem>>, %arg8: memref<8x32xf32, #tpu.memory_space<vmem>>) attributes {dimension_semantics = [#tpu.dimension_semantics<arbitrary>], iteration_bounds = array<i64: 1>, scalar_prefetch = 0 : i64, scratch_operands = 1 : i64, tpu.core_type = #tpu.core_type<tc>, window_params = [{transform_indices = @transform_0, window_bounds = array<i64: 24, 32>}, {transform_indices = @transform_1, window_bounds = array<i64: 24, 8>}, {pipeline_mode = #tpu.pipeline_mode<synchronous>, transform_indices = @transform_2, window_bounds = array<i64: 32, 64>}, {pipeline_mode = #tpu.pipeline_mode<synchronous>, transform_indices = @transform_3, window_bounds = array<i64: 2, 64>}, {pipeline_mode = #tpu.pipeline_mode<synchronous>, transform_indices = @transform_4, window_bounds = array<i64: 8, 1>}, {transform_indices = @transform_5, window_bounds = array<i64: 24, 64>}, {pipeline_mode = #tpu.pipeline_mode<synchronous>, transform_indices = @transform_6, window_bounds = array<i64: 2, 8>}]} {
    %c0_i32 = arith.constant 0 : i32
    %0 = arith.cmpi eq, %arg0, %c0_i32 : i32
    %1 = arith.extui %0 : i1 to i32
    %c0_i32_0 = arith.constant 0 : i32
    %2 = arith.cmpi ne, %1, %c0_i32_0 : i32
    scf.if %2 {
      %cst_15 = arith.constant 0.000000e+00 : f32
      %18 = vector.broadcast %cst_15 : f32 to vector<8x32xf32>
      %c0_16 = arith.constant 0 : index
      %c0_17 = arith.constant 0 : index
      %19 = vector.load %arg8[%c0_16, %c0_17] : memref<8x32xf32, #tpu.memory_space<vmem>>, vector<8x32xf32>
      tpu.vector_store %arg8[%c0_16, %c0_17], %18 {strides = array<i32>} : memref<8x32xf32, #tpu.memory_space<vmem>>, vector<8x32xf32>,
    } else {
    }
    %c0 = arith.constant 0 : index
    %c0_1 = arith.constant 0 : index
    %3 = vector.load %arg1[%c0, %c0_1] : memref<24x32xf32, #tpu.memory_space<vmem>>, vector<24x32xf32>
    %c0_2 = arith.constant 0 : index
    %c0_3 = arith.constant 0 : index
    %4 = vector.load %arg3[%c0_2, %c0_3] : memref<32x64xbf16, #tpu.memory_space<vmem>>, vector<32x64xbf16>
    %5 = arith.truncf %3 : vector<24x32xf32> to vector<24x32xbf16>
    %cst = arith.constant dense<0.000000e+00> : vector<24x64xf32>
    %6 = tpu.matmul %5, %4, %cst {dimension_numbers = #tpu.dot_dimension_numbers<[1], [0], [0], [1], [0, 0, 1, 1], [], []>} : vector<24x32xbf16>, vector<32x64xbf16>, vector<24x64xf32> -> vector<24x64xf32>
    %c0_4 = arith.constant 0 : index
    %c0_5 = arith.constant 0 : index
    %7 = vector.load %arg6[%c0_4, %c0_5] : memref<24x64xf32, #tpu.memory_space<vmem>>, vector<24x64xf32>
    tpu.vector_store %arg6[%c0_4, %c0_5], %6 {strides = array<i32>} : memref<24x64xf32, #tpu.memory_space<vmem>>, vector<24x64xf32>,
    %c0_6 = arith.constant 0 : index
    %c0_7 = arith.constant 0 : index
    %8 = vector.load %arg8[%c0_6, %c0_7] : memref<8x32xf32, #tpu.memory_space<vmem>>, vector<8x32xf32>
    %c0_8 = arith.constant 0 : index
    %c0_9 = arith.constant 0 : index
    %9 = vector.load %arg2[%c0_8, %c0_9] : memref<24x8xf32, #tpu.memory_space<vmem>>, vector<24x8xf32>
    %10 = arith.truncf %9 : vector<24x8xf32> to vector<24x8xbf16>
    %11 = arith.truncf %3 : vector<24x32xf32> to vector<24x32xbf16>
    %cst_10 = arith.constant dense<0.000000e+00> : vector<8x32xf32>
    %12 = tpu.matmul %10, %11, %cst_10 {dimension_numbers = #tpu.dot_dimension_numbers<[0], [0], [1], [1], [0, 1, 1, 1], [], []>} : vector<24x8xbf16>, vector<24x32xbf16>, vector<8x32xf32> -> vector<8x32xf32>
    %13 = arith.addf %8, %12 : vector<8x32xf32>
    %c0_11 = arith.constant 0 : index
    %c0_12 = arith.constant 0 : index
    %14 = vector.load %arg8[%c0_11, %c0_12] : memref<8x32xf32, #tpu.memory_space<vmem>>, vector<8x32xf32>
    tpu.vector_store %arg8[%c0_11, %c0_12], %13 {strides = array<i32>} : memref<8x32xf32, #tpu.memory_space<vmem>>, vector<8x32xf32>,
    %c0_i32_13 = arith.constant 0 : i32
    %15 = arith.cmpi eq, %arg0, %c0_i32_13 : i32
    %16 = arith.extui %15 : i1 to i32
    %c0_i32_14 = arith.constant 0 : i32
    %17 = arith.cmpi ne, %16, %c0_i32_14 : i32
    scf.if %17 {
      %c0_15 = arith.constant 0 : index
      %c0_16 = arith.constant 0 : index
      %18 = vector.load %arg8[%c0_15, %c0_16] : memref<8x32xf32, #tpu.memory_space<vmem>>, vector<8x32xf32>
      %c0_17 = arith.constant 0 : index
      %c0_18 = arith.constant 0 : index
      %19 = vector.load %arg5[%c0_17, %c0_18] : memref<8x1xf32, #tpu.memory_space<vmem>>, vector<8x1xf32>
      %20 = vector.broadcast %19 : vector<8x1xf32> to vector<8x32xf32>
      %21 = arith.mulf %18, %20 : vector<8x32xf32>
      %22 = arith.truncf %21 : vector<8x32xf32> to vector<8x32xbf16>
      %cst_19 = arith.constant dense<0.000000e+00> : vector<8x64xf32>
      %23 = tpu.matmul %22, %4, %cst_19 {dimension_numbers = #tpu.dot_dimension_numbers<[1], [0], [0], [1], [0, 0, 1, 1], [], []>} : vector<8x32xbf16>, vector<32x64xbf16>, vector<8x64xf32> -> vector<8x64xf32>
      %c0_20 = arith.constant 0 : index
      %c0_21 = arith.constant 0 : index
      %24 = vector.load %arg4[%c0_20, %c0_21] : memref<2x64xbf16, #tpu.memory_space<vmem>>, vector<2x64xbf16>
      %25 = arith.truncf %23 : vector<8x64xf32> to vector<8x64xbf16>
      %cst_22 = arith.constant dense<0.000000e+00> : vector<2x8xf32>
      %26 = tpu.matmul %24, %25, %cst_22 {dimension_numbers = #tpu.dot_dimension_numbers<[1], [1], [0], [0], [0, 0, 1, 0], [], []>} : vector<2x64xbf16>, vector<8x64xbf16>, vector<2x8xf32> -> vector<2x8xf32>
      %c0_23 = arith.constant 0 : index
      %c0_24 = arith.constant 0 : index
      %27 = vector.load %arg7[%c0_23, %c0_24] : memref<2x8xf32, #tpu.memory_space<vmem>>, vector<2x8xf32>
      tpu.vector_store %arg7[%c0_23, %c0_24], %26 {strides = array<i32>} : memref<2x8xf32, #tpu.memory_space<vmem>>, vector<2x8xf32>,
    } else {
    }
    return
  }
  func.func @transform_0(%arg0: i32) -> (i32, i32) {
    %c0_i32 = arith.constant 0 : i32
    %c0_i32_0 = arith.constant 0 : i32
    return %arg0, %c0_i32 : i32, i32
  }
  func.func @transform_1(%arg0: i32) -> (i32, i32) {
    %c0_i32 = arith.constant 0 : i32
    %c0_i32_0 = arith.constant 0 : i32
    return %arg0, %c0_i32 : i32, i32
  }
  func.func @transform_2(%arg0: i32) -> (i32, i32) {
    %c0_i32 = arith.constant 0 : i32
    %c0_i32_0 = arith.constant 0 : i32
    %c0_i32_1 = arith.constant 0 : i32
    return %c0_i32, %c0_i32_0 : i32, i32
  }
  func.func @transform_3(%arg0: i32) -> (i32, i32) {
    %c0_i32 = arith.constant 0 : i32
    %c0_i32_0 = arith.constant 0 : i32
    %c0_i32_1 = arith.constant 0 : i32
    return %c0_i32, %c0_i32_0 : i32, i32
  }
  func.func @transform_4(%arg0: i32) -> (i32, i32) {
    %c0_i32 = arith.constant 0 : i32
    %c0_i32_0 = arith.constant 0 : i32
    %c0_i32_1 = arith.constant 0 : i32
    return %c0_i32, %c0_i32_0 : i32, i32
  }
  func.func @transform_5(%arg0: i32) -> (i32, i32) {
    %c0_i32 = arith.constant 0 : i32
    %c0_i32_0 = arith.constant 0 : i32
    return %arg0, %c0_i32 : i32, i32
  }
  func.func @transform_6(%arg0: i32) -> (i32, i32) {
    %c0_i32 = arith.constant 0 : i32
    %c0_i32_0 = arith.constant 0 : i32
    %c0_i32_1 = arith.constant 0 : i32
    return %c0_i32, %c0_i32_0 : i32, i32
  }
}

module attributes {stable_mosaic.version = 11 : i64} {
  func.func @_conv_edge_feat_kernel(%arg0: i32, %arg1: memref<24x64xf32, #tpu.memory_space<vmem>>, %arg2: memref<24x8xf32, #tpu.memory_space<vmem>>, %arg3: memref<24x1xf32, #tpu.memory_space<vmem>>, %arg4: memref<2x32xf32, #tpu.memory_space<vmem>>, %arg5: memref<2x8xf32, #tpu.memory_space<vmem>>, %arg6: memref<8x1xf32, #tpu.memory_space<vmem>>, %arg7: memref<8x64xf32, #tpu.memory_space<vmem>>, %arg8: memref<8x64xf32, #tpu.memory_space<vmem>>) attributes {dimension_semantics = [#tpu.dimension_semantics<arbitrary>], iteration_bounds = array<i64: 1>, scalar_prefetch = 0 : i64, scratch_operands = 1 : i64, tpu.core_type = #tpu.core_type<tc>, window_params = [{transform_indices = @transform_0, window_bounds = array<i64: 24, 64>}, {transform_indices = @transform_1, window_bounds = array<i64: 24, 8>}, {transform_indices = @transform_2, window_bounds = array<i64: 24, 1>}, {pipeline_mode = #tpu.pipeline_mode<synchronous>, transform_indices = @transform_3, window_bounds = array<i64: 2, 32>}, {pipeline_mode = #tpu.pipeline_mode<synchronous>, transform_indices = @transform_4, window_bounds = array<i64: 2, 8>}, {pipeline_mode = #tpu.pipeline_mode<synchronous>, transform_indices = @transform_5, window_bounds = array<i64: 8, 1>}, {pipeline_mode = #tpu.pipeline_mode<synchronous>, transform_indices = @transform_6, window_bounds = array<i64: 8, 64>}]} {
    %c0_i32 = arith.constant 0 : i32
    %0 = arith.cmpi eq, %arg0, %c0_i32 : i32
    %1 = arith.extui %0 : i1 to i32
    %c0_i32_0 = arith.constant 0 : i32
    %2 = arith.cmpi ne, %1, %c0_i32_0 : i32
    scf.if %2 {
      %cst_27 = arith.constant 0.000000e+00 : f32
      %75 = vector.broadcast %cst_27 : f32 to vector<8x64xf32>
      %c0_28 = arith.constant 0 : index
      %c0_29 = arith.constant 0 : index
      %76 = vector.load %arg8[%c0_28, %c0_29] : memref<8x64xf32, #tpu.memory_space<vmem>>, vector<8x64xf32>
      tpu.vector_store %arg8[%c0_28, %c0_29], %75 {strides = array<i32>} : memref<8x64xf32, #tpu.memory_space<vmem>>, vector<8x64xf32>,
    } else {
    }
    %c0 = arith.constant 0 : index
    %c0_1 = arith.constant 0 : index
    %3 = vector.load %arg1[%c0, %c0_1] : memref<24x64xf32, #tpu.memory_space<vmem>>, vector<24x64xf32>
    %c0_2 = arith.constant 0 : index
    %c0_3 = arith.constant 0 : index
    %4 = vector.load %arg2[%c0_2, %c0_3] : memref<24x8xf32, #tpu.memory_space<vmem>>, vector<24x8xf32>
    %c0_4 = arith.constant 0 : index
    %c0_5 = arith.constant 0 : index
    %5 = vector.load %arg3[%c0_4, %c0_5] : memref<24x1xf32, #tpu.memory_space<vmem>>, vector<24x1xf32>
    %c0_6 = arith.constant 0 : index
    %c0_7 = arith.constant 0 : index
    %6 = vector.load %arg4[%c0_6, %c0_7] : memref<2x32xf32, #tpu.memory_space<vmem>>, vector<2x32xf32>
    %c0_8 = arith.constant 0 : index
    %c0_9 = arith.constant 0 : index
    %7 = vector.load %arg5[%c0_8, %c0_9] : memref<2x8xf32, #tpu.memory_space<vmem>>, vector<2x8xf32>
    %8 = vector.extract_strided_slice %3 {offsets = [0, 0], sizes = [24, 32], strides = [1, 1]} : vector<24x64xf32> to vector<24x32xf32>
    %9 = vector.extract_strided_slice %6 {offsets = [0, 0], sizes = [1, 32], strides = [1, 1]} : vector<2x32xf32> to vector<1x32xf32>
    %10 = vector.broadcast %9 : vector<1x32xf32> to vector<24x32xf32>
    %11 = arith.mulf %8, %10 : vector<24x32xf32>
    %cst = arith.constant dense<0.000000e+00> : vector<24xf32>
    %12 = vector.multi_reduction <add>, %11, %cst [1] : vector<24x32xf32> to vector<24xf32>
    %13 = vector.shape_cast %12 : vector<24xf32> to vector<24x1xf32>
    %14 = vector.extract_strided_slice %7 {offsets = [0, 0], sizes = [1, 8], strides = [1, 1]} : vector<2x8xf32> to vector<1x8xf32>
    %15 = vector.broadcast %13 : vector<24x1xf32> to vector<24x8xf32>
    %16 = vector.broadcast %14 : vector<1x8xf32> to vector<24x8xf32>
    %17 = arith.addf %15, %16 : vector<24x8xf32>
    %cst_10 = arith.constant 0.000000e+00 : f32
    %18 = vector.broadcast %cst_10 : f32 to vector<24x8xf32>
    %19 = arith.cmpf ogt, %17, %18 : vector<24x8xf32>
    %cst_11 = arith.constant 2.000000e-01 : f32
    %20 = vector.broadcast %cst_11 : f32 to vector<24x8xf32>
    %21 = arith.mulf %20, %17 : vector<24x8xf32>
    %22 = arith.select %19, %17, %21 : vector<24x8xi1>, vector<24x8xf32>
    %23 = arith.addf %22, %4 : vector<24x8xf32>
    %cst_12 = arith.constant dense<0xFF800000> : vector<24xf32>
    %24 = vector.multi_reduction <maximumf>, %23, %cst_12 [1] : vector<24x8xf32> to vector<24xf32>
    %25 = vector.shape_cast %24 : vector<24xf32> to vector<24x1xf32>
    %26 = vector.broadcast %25 : vector<24x1xf32> to vector<24x8xf32>
    %27 = arith.subf %23, %26 : vector<24x8xf32>
    %28 = math.exp %27 : vector<24x8xf32>
    %cst_13 = arith.constant dense<0.000000e+00> : vector<24xf32>
    %29 = vector.multi_reduction <add>, %28, %cst_13 [1] : vector<24x8xf32> to vector<24xf32>
    %30 = vector.shape_cast %29 : vector<24xf32> to vector<24x1xf32>
    %31 = tpu.reciprocal %30 {approx = true} : vector<24x1xf32> -> vector<24x1xf32>
    %32 = arith.mulf %5, %31 : vector<24x1xf32>
    %33 = vector.broadcast %32 : vector<24x1xf32> to vector<24x8xf32>
    %34 = arith.mulf %28, %33 : vector<24x8xf32>
    %35 = arith.truncf %34 : vector<24x8xf32> to vector<24x8xbf16>
    %36 = arith.truncf %8 : vector<24x32xf32> to vector<24x32xbf16>
    %cst_14 = arith.constant dense<0.000000e+00> : vector<8x32xf32>
    %37 = tpu.matmul %35, %36, %cst_14 {dimension_numbers = #tpu.dot_dimension_numbers<[0], [0], [1], [1], [0, 1, 1, 1], [], []>} : vector<24x8xbf16>, vector<24x32xbf16>, vector<8x32xf32> -> vector<8x32xf32>
    %38 = vector.extract_strided_slice %3 {offsets = [0, 32], sizes = [24, 32], strides = [1, 1]} : vector<24x64xf32> to vector<24x32xf32>
    %39 = vector.extract_strided_slice %6 {offsets = [1, 0], sizes = [1, 32], strides = [1, 1]} : vector<2x32xf32> to vector<1x32xf32>
    %40 = vector.broadcast %39 : vector<1x32xf32> to vector<24x32xf32>
    %41 = arith.mulf %38, %40 : vector<24x32xf32>
    %cst_15 = arith.constant dense<0.000000e+00> : vector<24xf32>
    %42 = vector.multi_reduction <add>, %41, %cst_15 [1] : vector<24x32xf32> to vector<24xf32>
    %43 = vector.shape_cast %42 : vector<24xf32> to vector<24x1xf32>
    %44 = vector.extract_strided_slice %7 {offsets = [1, 0], sizes = [1, 8], strides = [1, 1]} : vector<2x8xf32> to vector<1x8xf32>
    %45 = vector.broadcast %43 : vector<24x1xf32> to vector<24x8xf32>
    %46 = vector.broadcast %44 : vector<1x8xf32> to vector<24x8xf32>
    %47 = arith.addf %45, %46 : vector<24x8xf32>
    %cst_16 = arith.constant 0.000000e+00 : f32
    %48 = vector.broadcast %cst_16 : f32 to vector<24x8xf32>
    %49 = arith.cmpf ogt, %47, %48 : vector<24x8xf32>
    %cst_17 = arith.constant 2.000000e-01 : f32
    %50 = vector.broadcast %cst_17 : f32 to vector<24x8xf32>
    %51 = arith.mulf %50, %47 : vector<24x8xf32>
    %52 = arith.select %49, %47, %51 : vector<24x8xi1>, vector<24x8xf32>
    %53 = arith.addf %52, %4 : vector<24x8xf32>
    %cst_18 = arith.constant dense<0xFF800000> : vector<24xf32>
    %54 = vector.multi_reduction <maximumf>, %53, %cst_18 [1] : vector<24x8xf32> to vector<24xf32>
    %55 = vector.shape_cast %54 : vector<24xf32> to vector<24x1xf32>
    %56 = vector.broadcast %55 : vector<24x1xf32> to vector<24x8xf32>
    %57 = arith.subf %53, %56 : vector<24x8xf32>
    %58 = math.exp %57 : vector<24x8xf32>
    %cst_19 = arith.constant dense<0.000000e+00> : vector<24xf32>
    %59 = vector.multi_reduction <add>, %58, %cst_19 [1] : vector<24x8xf32> to vector<24xf32>
    %60 = vector.shape_cast %59 : vector<24xf32> to vector<24x1xf32>
    %61 = tpu.reciprocal %60 {approx = true} : vector<24x1xf32> -> vector<24x1xf32>
    %62 = arith.mulf %5, %61 : vector<24x1xf32>
    %63 = vector.broadcast %62 : vector<24x1xf32> to vector<24x8xf32>
    %64 = arith.mulf %58, %63 : vector<24x8xf32>
    %65 = arith.truncf %64 : vector<24x8xf32> to vector<24x8xbf16>
    %66 = arith.truncf %38 : vector<24x32xf32> to vector<24x32xbf16>
    %cst_20 = arith.constant dense<0.000000e+00> : vector<8x32xf32>
    %67 = tpu.matmul %65, %66, %cst_20 {dimension_numbers = #tpu.dot_dimension_numbers<[0], [0], [1], [1], [0, 1, 1, 1], [], []>} : vector<24x8xbf16>, vector<24x32xbf16>, vector<8x32xf32> -> vector<8x32xf32>
    %c0_21 = arith.constant 0 : index
    %c0_22 = arith.constant 0 : index
    %68 = vector.load %arg8[%c0_21, %c0_22] : memref<8x64xf32, #tpu.memory_space<vmem>>, vector<8x64xf32>
    %69 = tpu.concatenate %37, %67 in 1 : vector<8x32xf32>, vector<8x32xf32> -> vector<8x64xf32>
    %70 = arith.addf %68, %69 : vector<8x64xf32>
    %c0_23 = arith.constant 0 : index
    %c0_24 = arith.constant 0 : index
    %71 = vector.load %arg8[%c0_23, %c0_24] : memref<8x64xf32, #tpu.memory_space<vmem>>, vector<8x64xf32>
    tpu.vector_store %arg8[%c0_23, %c0_24], %70 {strides = array<i32>} : memref<8x64xf32, #tpu.memory_space<vmem>>, vector<8x64xf32>,
    %c0_i32_25 = arith.constant 0 : i32
    %72 = arith.cmpi eq, %arg0, %c0_i32_25 : i32
    %73 = arith.extui %72 : i1 to i32
    %c0_i32_26 = arith.constant 0 : i32
    %74 = arith.cmpi ne, %73, %c0_i32_26 : i32
    scf.if %74 {
      %c0_27 = arith.constant 0 : index
      %c0_28 = arith.constant 0 : index
      %75 = vector.load %arg8[%c0_27, %c0_28] : memref<8x64xf32, #tpu.memory_space<vmem>>, vector<8x64xf32>
      %c0_29 = arith.constant 0 : index
      %c0_30 = arith.constant 0 : index
      %76 = vector.load %arg6[%c0_29, %c0_30] : memref<8x1xf32, #tpu.memory_space<vmem>>, vector<8x1xf32>
      %77 = vector.broadcast %76 : vector<8x1xf32> to vector<8x64xf32>
      %78 = arith.mulf %75, %77 : vector<8x64xf32>
      %c0_31 = arith.constant 0 : index
      %c0_32 = arith.constant 0 : index
      %79 = vector.load %arg7[%c0_31, %c0_32] : memref<8x64xf32, #tpu.memory_space<vmem>>, vector<8x64xf32>
      tpu.vector_store %arg7[%c0_31, %c0_32], %78 {strides = array<i32>} : memref<8x64xf32, #tpu.memory_space<vmem>>, vector<8x64xf32>,
    } else {
    }
    return
  }
  func.func @transform_0(%arg0: i32) -> (i32, i32) {
    %c0_i32 = arith.constant 0 : i32
    %c0_i32_0 = arith.constant 0 : i32
    return %arg0, %c0_i32 : i32, i32
  }
  func.func @transform_1(%arg0: i32) -> (i32, i32) {
    %c0_i32 = arith.constant 0 : i32
    %c0_i32_0 = arith.constant 0 : i32
    return %arg0, %c0_i32 : i32, i32
  }
  func.func @transform_2(%arg0: i32) -> (i32, i32) {
    %c0_i32 = arith.constant 0 : i32
    %c0_i32_0 = arith.constant 0 : i32
    return %arg0, %c0_i32 : i32, i32
  }
  func.func @transform_3(%arg0: i32) -> (i32, i32) {
    %c0_i32 = arith.constant 0 : i32
    %c0_i32_0 = arith.constant 0 : i32
    %c0_i32_1 = arith.constant 0 : i32
    return %c0_i32, %c0_i32_0 : i32, i32
  }
  func.func @transform_4(%arg0: i32) -> (i32, i32) {
    %c0_i32 = arith.constant 0 : i32
    %c0_i32_0 = arith.constant 0 : i32
    %c0_i32_1 = arith.constant 0 : i32
    return %c0_i32, %c0_i32_0 : i32, i32
  }
  func.func @transform_5(%arg0: i32) -> (i32, i32) {
    %c0_i32 = arith.constant 0 : i32
    %c0_i32_0 = arith.constant 0 : i32
    %c0_i32_1 = arith.constant 0 : i32
    return %c0_i32, %c0_i32_0 : i32, i32
  }
  func.func @transform_6(%arg0: i32) -> (i32, i32) {
    %c0_i32 = arith.constant 0 : i32
    %c0_i32_0 = arith.constant 0 : i32
    %c0_i32_1 = arith.constant 0 : i32
    return %c0_i32, %c0_i32_0 : i32, i32
  }
}

module attributes {stable_mosaic.version = 11 : i64} {
  func.func @_conv_node_out_kernel(%arg0: i32, %arg1: memref<24x64xf32, #tpu.memory_space<vmem>>, %arg2: memref<24x8xf32, #tpu.memory_space<vmem>>, %arg3: memref<24x1xf32, #tpu.memory_space<vmem>>, %arg4: memref<24x1xf32, #tpu.memory_space<vmem>>, %arg5: memref<2x32xf32, #tpu.memory_space<vmem>>, %arg6: memref<2x8xf32, #tpu.memory_space<vmem>>, %arg7: memref<8x64xf32, #tpu.memory_space<vmem>>, %arg8: memref<1x32xf32, #tpu.memory_space<vmem>>, %arg9: memref<24x32xf32, #tpu.memory_space<vmem>>) attributes {dimension_semantics = [#tpu.dimension_semantics<parallel>], iteration_bounds = array<i64: 1>, scalar_prefetch = 0 : i64, scratch_operands = 0 : i64, tpu.core_type = #tpu.core_type<tc>, window_params = [{transform_indices = @transform_0, window_bounds = array<i64: 24, 64>}, {transform_indices = @transform_1, window_bounds = array<i64: 24, 8>}, {transform_indices = @transform_2, window_bounds = array<i64: 24, 1>}, {transform_indices = @transform_3, window_bounds = array<i64: 24, 1>}, {pipeline_mode = #tpu.pipeline_mode<synchronous>, transform_indices = @transform_4, window_bounds = array<i64: 2, 32>}, {pipeline_mode = #tpu.pipeline_mode<synchronous>, transform_indices = @transform_5, window_bounds = array<i64: 2, 8>}, {pipeline_mode = #tpu.pipeline_mode<synchronous>, transform_indices = @transform_6, window_bounds = array<i64: 8, 64>}, {pipeline_mode = #tpu.pipeline_mode<synchronous>, transform_indices = @transform_7, window_bounds = array<i64: 1, 32>}, {transform_indices = @transform_8, window_bounds = array<i64: 24, 32>}]} {
    %c0 = arith.constant 0 : index
    %c0_0 = arith.constant 0 : index
    %0 = vector.load %arg1[%c0, %c0_0] : memref<24x64xf32, #tpu.memory_space<vmem>>, vector<24x64xf32>
    %c0_1 = arith.constant 0 : index
    %c0_2 = arith.constant 0 : index
    %1 = vector.load %arg2[%c0_1, %c0_2] : memref<24x8xf32, #tpu.memory_space<vmem>>, vector<24x8xf32>
    %c0_3 = arith.constant 0 : index
    %c0_4 = arith.constant 0 : index
    %2 = vector.load %arg3[%c0_3, %c0_4] : memref<24x1xf32, #tpu.memory_space<vmem>>, vector<24x1xf32>
    %c0_5 = arith.constant 0 : index
    %c0_6 = arith.constant 0 : index
    %3 = vector.load %arg5[%c0_5, %c0_6] : memref<2x32xf32, #tpu.memory_space<vmem>>, vector<2x32xf32>
    %c0_7 = arith.constant 0 : index
    %c0_8 = arith.constant 0 : index
    %4 = vector.load %arg6[%c0_7, %c0_8] : memref<2x8xf32, #tpu.memory_space<vmem>>, vector<2x8xf32>
    %c0_9 = arith.constant 0 : index
    %c0_10 = arith.constant 0 : index
    %5 = vector.load %arg7[%c0_9, %c0_10] : memref<8x64xf32, #tpu.memory_space<vmem>>, vector<8x64xf32>
    %cst = arith.constant 0.000000e+00 : f32
    %6 = vector.broadcast %cst : f32 to vector<24x32xf32>
    %7 = vector.extract_strided_slice %0 {offsets = [0, 0], sizes = [24, 32], strides = [1, 1]} : vector<24x64xf32> to vector<24x32xf32>
    %8 = vector.extract_strided_slice %3 {offsets = [0, 0], sizes = [1, 32], strides = [1, 1]} : vector<2x32xf32> to vector<1x32xf32>
    %9 = vector.broadcast %8 : vector<1x32xf32> to vector<24x32xf32>
    %10 = arith.mulf %7, %9 : vector<24x32xf32>
    %cst_11 = arith.constant dense<0.000000e+00> : vector<24xf32>
    %11 = vector.multi_reduction <add>, %10, %cst_11 [1] : vector<24x32xf32> to vector<24xf32>
    %12 = vector.shape_cast %11 : vector<24xf32> to vector<24x1xf32>
    %13 = vector.extract_strided_slice %4 {offsets = [0, 0], sizes = [1, 8], strides = [1, 1]} : vector<2x8xf32> to vector<1x8xf32>
    %14 = vector.broadcast %12 : vector<24x1xf32> to vector<24x8xf32>
    %15 = vector.broadcast %13 : vector<1x8xf32> to vector<24x8xf32>
    %16 = arith.addf %14, %15 : vector<24x8xf32>
    %cst_12 = arith.constant 0.000000e+00 : f32
    %17 = vector.broadcast %cst_12 : f32 to vector<24x8xf32>
    %18 = arith.cmpf ogt, %16, %17 : vector<24x8xf32>
    %cst_13 = arith.constant 2.000000e-01 : f32
    %19 = vector.broadcast %cst_13 : f32 to vector<24x8xf32>
    %20 = arith.mulf %19, %16 : vector<24x8xf32>
    %21 = arith.select %18, %16, %20 : vector<24x8xi1>, vector<24x8xf32>
    %22 = arith.addf %21, %1 : vector<24x8xf32>
    %cst_14 = arith.constant dense<0xFF800000> : vector<24xf32>
    %23 = vector.multi_reduction <maximumf>, %22, %cst_14 [1] : vector<24x8xf32> to vector<24xf32>
    %24 = vector.shape_cast %23 : vector<24xf32> to vector<24x1xf32>
    %25 = vector.broadcast %24 : vector<24x1xf32> to vector<24x8xf32>
    %26 = arith.subf %22, %25 : vector<24x8xf32>
    %27 = math.exp %26 : vector<24x8xf32>
    %cst_15 = arith.constant dense<0.000000e+00> : vector<24xf32>
    %28 = vector.multi_reduction <add>, %27, %cst_15 [1] : vector<24x8xf32> to vector<24xf32>
    %29 = vector.shape_cast %28 : vector<24xf32> to vector<24x1xf32>
    %30 = tpu.reciprocal %29 {approx = true} : vector<24x1xf32> -> vector<24x1xf32>
    %31 = arith.mulf %2, %30 : vector<24x1xf32>
    %32 = vector.broadcast %31 : vector<24x1xf32> to vector<24x8xf32>
    %33 = arith.mulf %27, %32 : vector<24x8xf32>
    %34 = vector.extract_strided_slice %5 {offsets = [0, 0], sizes = [8, 32], strides = [1, 1]} : vector<8x64xf32> to vector<8x32xf32>
    %35 = arith.truncf %33 : vector<24x8xf32> to vector<24x8xbf16>
    %36 = arith.truncf %34 : vector<8x32xf32> to vector<8x32xbf16>
    %cst_16 = arith.constant dense<0.000000e+00> : vector<24x32xf32>
    %37 = tpu.matmul %35, %36, %cst_16 {dimension_numbers = #tpu.dot_dimension_numbers<[1], [0], [0], [1], [0, 0, 1, 1], [], []>} : vector<24x8xbf16>, vector<8x32xbf16>, vector<24x32xf32> -> vector<24x32xf32>
    %38 = arith.addf %6, %37 : vector<24x32xf32>
    %39 = vector.extract_strided_slice %0 {offsets = [0, 32], sizes = [24, 32], strides = [1, 1]} : vector<24x64xf32> to vector<24x32xf32>
    %40 = vector.extract_strided_slice %3 {offsets = [1, 0], sizes = [1, 32], strides = [1, 1]} : vector<2x32xf32> to vector<1x32xf32>
    %41 = vector.broadcast %40 : vector<1x32xf32> to vector<24x32xf32>
    %42 = arith.mulf %39, %41 : vector<24x32xf32>
    %cst_17 = arith.constant dense<0.000000e+00> : vector<24xf32>
    %43 = vector.multi_reduction <add>, %42, %cst_17 [1] : vector<24x32xf32> to vector<24xf32>
    %44 = vector.shape_cast %43 : vector<24xf32> to vector<24x1xf32>
    %45 = vector.extract_strided_slice %4 {offsets = [1, 0], sizes = [1, 8], strides = [1, 1]} : vector<2x8xf32> to vector<1x8xf32>
    %46 = vector.broadcast %44 : vector<24x1xf32> to vector<24x8xf32>
    %47 = vector.broadcast %45 : vector<1x8xf32> to vector<24x8xf32>
    %48 = arith.addf %46, %47 : vector<24x8xf32>
    %cst_18 = arith.constant 0.000000e+00 : f32
    %49 = vector.broadcast %cst_18 : f32 to vector<24x8xf32>
    %50 = arith.cmpf ogt, %48, %49 : vector<24x8xf32>
    %cst_19 = arith.constant 2.000000e-01 : f32
    %51 = vector.broadcast %cst_19 : f32 to vector<24x8xf32>
    %52 = arith.mulf %51, %48 : vector<24x8xf32>
    %53 = arith.select %50, %48, %52 : vector<24x8xi1>, vector<24x8xf32>
    %54 = arith.addf %53, %1 : vector<24x8xf32>
    %cst_20 = arith.constant dense<0xFF800000> : vector<24xf32>
    %55 = vector.multi_reduction <maximumf>, %54, %cst_20 [1] : vector<24x8xf32> to vector<24xf32>
    %56 = vector.shape_cast %55 : vector<24xf32> to vector<24x1xf32>
    %57 = vector.broadcast %56 : vector<24x1xf32> to vector<24x8xf32>
    %58 = arith.subf %54, %57 : vector<24x8xf32>
    %59 = math.exp %58 : vector<24x8xf32>
    %cst_21 = arith.constant dense<0.000000e+00> : vector<24xf32>
    %60 = vector.multi_reduction <add>, %59, %cst_21 [1] : vector<24x8xf32> to vector<24xf32>
    %61 = vector.shape_cast %60 : vector<24xf32> to vector<24x1xf32>
    %62 = tpu.reciprocal %61 {approx = true} : vector<24x1xf32> -> vector<24x1xf32>
    %63 = arith.mulf %2, %62 : vector<24x1xf32>
    %64 = vector.broadcast %63 : vector<24x1xf32> to vector<24x8xf32>
    %65 = arith.mulf %59, %64 : vector<24x8xf32>
    %66 = vector.extract_strided_slice %5 {offsets = [0, 32], sizes = [8, 32], strides = [1, 1]} : vector<8x64xf32> to vector<8x32xf32>
    %67 = arith.truncf %65 : vector<24x8xf32> to vector<24x8xbf16>
    %68 = arith.truncf %66 : vector<8x32xf32> to vector<8x32xbf16>
    %cst_22 = arith.constant dense<0.000000e+00> : vector<24x32xf32>
    %69 = tpu.matmul %67, %68, %cst_22 {dimension_numbers = #tpu.dot_dimension_numbers<[1], [0], [0], [1], [0, 0, 1, 1], [], []>} : vector<24x8xbf16>, vector<8x32xbf16>, vector<24x32xf32> -> vector<24x32xf32>
    %70 = arith.addf %38, %69 : vector<24x32xf32>
    %c0_23 = arith.constant 0 : index
    %c0_24 = arith.constant 0 : index
    %71 = vector.load %arg4[%c0_23, %c0_24] : memref<24x1xf32, #tpu.memory_space<vmem>>, vector<24x1xf32>
    %72 = vector.broadcast %71 : vector<24x1xf32> to vector<24x32xf32>
    %73 = arith.mulf %70, %72 : vector<24x32xf32>
    %c0_25 = arith.constant 0 : index
    %c0_26 = arith.constant 0 : index
    %74 = vector.load %arg8[%c0_25, %c0_26] : memref<1x32xf32, #tpu.memory_space<vmem>>, vector<1x32xf32>
    %75 = vector.broadcast %74 : vector<1x32xf32> to vector<24x32xf32>
    %76 = arith.addf %73, %75 : vector<24x32xf32>
    %c0_27 = arith.constant 0 : index
    %c0_28 = arith.constant 0 : index
    %77 = vector.load %arg9[%c0_27, %c0_28] : memref<24x32xf32, #tpu.memory_space<vmem>>, vector<24x32xf32>
    tpu.vector_store %arg9[%c0_27, %c0_28], %76 {strides = array<i32>} : memref<24x32xf32, #tpu.memory_space<vmem>>, vector<24x32xf32>,
    return
  }
  func.func @transform_0(%arg0: i32) -> (i32, i32) {
    %c0_i32 = arith.constant 0 : i32
    %c0_i32_0 = arith.constant 0 : i32
    return %arg0, %c0_i32 : i32, i32
  }
  func.func @transform_1(%arg0: i32) -> (i32, i32) {
    %c0_i32 = arith.constant 0 : i32
    %c0_i32_0 = arith.constant 0 : i32
    return %arg0, %c0_i32 : i32, i32
  }
  func.func @transform_2(%arg0: i32) -> (i32, i32) {
    %c0_i32 = arith.constant 0 : i32
    %c0_i32_0 = arith.constant 0 : i32
    return %arg0, %c0_i32 : i32, i32
  }
  func.func @transform_3(%arg0: i32) -> (i32, i32) {
    %c0_i32 = arith.constant 0 : i32
    %c0_i32_0 = arith.constant 0 : i32
    return %arg0, %c0_i32 : i32, i32
  }
  func.func @transform_4(%arg0: i32) -> (i32, i32) {
    %c0_i32 = arith.constant 0 : i32
    %c0_i32_0 = arith.constant 0 : i32
    %c0_i32_1 = arith.constant 0 : i32
    return %c0_i32, %c0_i32_0 : i32, i32
  }
  func.func @transform_5(%arg0: i32) -> (i32, i32) {
    %c0_i32 = arith.constant 0 : i32
    %c0_i32_0 = arith.constant 0 : i32
    %c0_i32_1 = arith.constant 0 : i32
    return %c0_i32, %c0_i32_0 : i32, i32
  }
  func.func @transform_6(%arg0: i32) -> (i32, i32) {
    %c0_i32 = arith.constant 0 : i32
    %c0_i32_0 = arith.constant 0 : i32
    %c0_i32_1 = arith.constant 0 : i32
    return %c0_i32, %c0_i32_0 : i32, i32
  }
  func.func @transform_7(%arg0: i32) -> (i32, i32) {
    %c0_i32 = arith.constant 0 : i32
    %c0_i32_0 = arith.constant 0 : i32
    %c0_i32_1 = arith.constant 0 : i32
    return %c0_i32, %c0_i32_0 : i32, i32
  }
  func.func @transform_8(%arg0: i32) -> (i32, i32) {
    %c0_i32 = arith.constant 0 : i32
    %c0_i32_0 = arith.constant 0 : i32
    return %arg0, %c0_i32 : i32, i32
  }
}

module attributes {stable_mosaic.version = 11 : i64} {
  func.func @_sum_exp_proj_kernel(%arg0: i32, %arg1: memref<24x32xf32, #tpu.memory_space<vmem>>, %arg2: memref<24x32xf32, #tpu.memory_space<vmem>>, %arg3: memref<24x32xf32, #tpu.memory_space<vmem>>, %arg4: memref<24x32xf32, #tpu.memory_space<vmem>>) attributes {dimension_semantics = [#tpu.dimension_semantics<parallel>], iteration_bounds = array<i64: 1>, scalar_prefetch = 0 : i64, scratch_operands = 0 : i64, tpu.core_type = #tpu.core_type<tc>, window_params = [{transform_indices = @transform_0, window_bounds = array<i64: 24, 32>}, {transform_indices = @transform_1, window_bounds = array<i64: 24, 32>}, {transform_indices = @transform_2, window_bounds = array<i64: 24, 32>}, {transform_indices = @transform_3, window_bounds = array<i64: 24, 32>}]} {
    %c0 = arith.constant 0 : index
    %c0_0 = arith.constant 0 : index
    %0 = vector.load %arg1[%c0, %c0_0] : memref<24x32xf32, #tpu.memory_space<vmem>>, vector<24x32xf32>
    %c0_1 = arith.constant 0 : index
    %c0_2 = arith.constant 0 : index
    %1 = vector.load %arg2[%c0_1, %c0_2] : memref<24x32xf32, #tpu.memory_space<vmem>>, vector<24x32xf32>
    %2 = arith.addf %0, %1 : vector<24x32xf32>
    %c0_3 = arith.constant 0 : index
    %c0_4 = arith.constant 0 : index
    %3 = vector.load %arg3[%c0_3, %c0_4] : memref<24x32xf32, #tpu.memory_space<vmem>>, vector<24x32xf32>
    %4 = arith.addf %2, %3 : vector<24x32xf32>
    %cst = arith.constant 0.333333343 : f32
    %5 = vector.broadcast %cst : f32 to vector<24x32xf32>
    %6 = arith.mulf %4, %5 : vector<24x32xf32>
    %7 = arith.mulf %6, %6 : vector<24x32xf32>
    %cst_5 = arith.constant dense<0.000000e+00> : vector<24xf32>
    %8 = vector.multi_reduction <add>, %7, %cst_5 [1] : vector<24x32xf32> to vector<24xf32>
    %9 = vector.shape_cast %8 : vector<24xf32> to vector<24x1xf32>
    %10 = math.sqrt %9 : vector<24x1xf32>
    %cst_6 = arith.constant 1.000000e-15 : f32
    %11 = vector.broadcast %cst_6 : f32 to vector<24x1xf32>
    %12 = arith.maximumf %10, %11 : vector<24x1xf32>
    %cst_7 = arith.constant 1.000000e+00 : f32
    %13 = vector.broadcast %cst_7 : f32 to vector<24x1xf32>
    %14 = arith.mulf %13, %12 : vector<24x1xf32>
    %15 = math.tanh %14 : vector<24x1xf32>
    %16 = vector.broadcast %15 : vector<24x1xf32> to vector<24x32xf32>
    %17 = arith.mulf %16, %6 : vector<24x32xf32>
    %cst_8 = arith.constant 1.000000e+00 : f32
    %18 = vector.broadcast %cst_8 : f32 to vector<24x1xf32>
    %19 = arith.mulf %18, %12 : vector<24x1xf32>
    %20 = vector.broadcast %19 : vector<24x1xf32> to vector<24x32xf32>
    %21 = arith.divf %17, %20 : vector<24x32xf32>
    %22 = arith.mulf %21, %21 : vector<24x32xf32>
    %cst_9 = arith.constant dense<0.000000e+00> : vector<24xf32>
    %23 = vector.multi_reduction <add>, %22, %cst_9 [1] : vector<24x32xf32> to vector<24xf32>
    %24 = vector.shape_cast %23 : vector<24xf32> to vector<24x1xf32>
    %25 = math.sqrt %24 : vector<24x1xf32>
    %cst_10 = arith.constant 1.000000e-15 : f32
    %26 = vector.broadcast %cst_10 : f32 to vector<24x1xf32>
    %27 = arith.maximumf %25, %26 : vector<24x1xf32>
    %cst_11 = arith.constant 0.995999991 : f32
    %28 = vector.broadcast %cst_11 : f32 to vector<24x1xf32>
    %29 = arith.cmpf ogt, %27, %28 : vector<24x1xf32>
    %30 = vector.broadcast %27 : vector<24x1xf32> to vector<24x32xf32>
    %31 = arith.divf %21, %30 : vector<24x32xf32>
    %cst_12 = arith.constant 0.995999991 : f32
    %32 = vector.broadcast %cst_12 : f32 to vector<24x32xf32>
    %33 = arith.mulf %31, %32 : vector<24x32xf32>
    %34 = vector.shape_cast %29 : vector<24x1xi1> to vector<24x1xi1>
    %35 = vector.broadcast %34 : vector<24x1xi1> to vector<24x32xi1>
    %36 = arith.select %35, %33, %21 : vector<24x32xi1>, vector<24x32xf32>
    %c0_13 = arith.constant 0 : index
    %c0_14 = arith.constant 0 : index
    %37 = vector.load %arg4[%c0_13, %c0_14] : memref<24x32xf32, #tpu.memory_space<vmem>>, vector<24x32xf32>
    tpu.vector_store %arg4[%c0_13, %c0_14], %36 {strides = array<i32>} : memref<24x32xf32, #tpu.memory_space<vmem>>, vector<24x32xf32>,
    return
  }
  func.func @transform_0(%arg0: i32) -> (i32, i32) {
    %c0_i32 = arith.constant 0 : i32
    %c0_i32_0 = arith.constant 0 : i32
    return %arg0, %c0_i32 : i32, i32
  }
  func.func @transform_1(%arg0: i32) -> (i32, i32) {
    %c0_i32 = arith.constant 0 : i32
    %c0_i32_0 = arith.constant 0 : i32
    return %arg0, %c0_i32 : i32, i32
  }
  func.func @transform_2(%arg0: i32) -> (i32, i32) {
    %c0_i32 = arith.constant 0 : i32
    %c0_i32_0 = arith.constant 0 : i32
    return %arg0, %c0_i32 : i32, i32
  }
  func.func @transform_3(%arg0: i32) -> (i32, i32) {
    %c0_i32 = arith.constant 0 : i32
    %c0_i32_0 = arith.constant 0 : i32
    return %arg0, %c0_i32 : i32, i32
  }
}

</mosaic_0001>

<llo_original>
// kernel: h2_graph_convolution_forward.8
$region0: #{h2_graph_convolution_forward.8}
  #allocation0 [shape = 'u32[]', space=smem, size = 0x4, offset = 0x4, fixed_abs, tag = 'smem constant byte address 0x4 - core index']
  #allocation1 [shape = 'u32[72,128]{1,0:T(1,128)}', space=vmem, size = 0x9000, scoped, tag = 'internal scratch']
  %s0 = inlined_call_operand.vmem [shape: f32[24,32], index: 0, kind: input, shape index: {}]
  %s1 = inlined_call_operand.vmem [shape: f32[24,32], index: 1, kind: output, shape index: {}]
  %s2 = sld [smem:[#allocation0]]
  $region14: #{h2_graph_convolution_forward.8} parent=0
    _
  %s4 = ssub.s32 1, %s2
  %s5 = scalar_select 0, %s4, %s2
  // Predicated region
  $region2: #{h2_graph_convolution_forward.8} parent=0 // pred_check
    _
  $region3: #{h2_graph_convolution_forward.8} parent=0 // pred_check_branch
    %7 = sbr.rel (0) target = $region5
  $region4: #{h2_graph_convolution_forward.8} parent=0 // pred_region
    _
  $region5: #{h2_graph_convolution_forward.8} parent=0 // pred_fallthru
    _
  %v8 = vld [vmem:[%s0] sm:$0xff]
  %v9 = vld [vmem:[%s0 + $0x8] sm:$0xff]
  %v10 = vld [vmem:[%s0 + $0x10] sm:$0xff]
  %v11 = vmul.f32 %v8, %v8
  %v12 = vmul.f32 %v9, %v9
  %v13 = vmul.f32 %v10, %v10
  %vm14 = vcmask 261120
  %v15 = vsel %vm14, %v11, 0.0
  %16 = vadd.xlane.f32.xlu0 %v15
  %v17 = vpop.xlane.xlu0 %16
  %v18 = vsel %vm14, %v12, 0.0
  %19 = vadd.xlane.f32.xlu0 %v18
  %v20 = vpop.xlane.xlu0 %19
  %v21 = vsel %vm14, %v13, 0.0
  %22 = vadd.xlane.f32.xlu0 %v21
  %v23 = vpop.xlane.xlu0 %22
  %v24 = vrsqrt.pop %v17
  %v25 = vmul.f32 %v24, %v17
  %v26 = vmul.f32 %v25, %v24
  %v27 = vmul.f32 0.5, %v26
  %v28 = vsub.f32 1.5, %v27
  %v29 = vmul.f32 %v24, %v28
  %v30 = vmul.f32 %v17, %v29
  %vm31 = vcmp.eq.f32.partialorder %v17, inf
  %v32 = vsel %vm31, %v17, %v30
  %vm33 = vcmp.eq.f32.partialorder %v17, 0.0
  %v34 = vand.u32 %v17, 2147483648
  %v35 = vsel %vm33, %v34, %v32
  %v36 = vrsqrt.pop %v20
  %v37 = vmul.f32 %v36, %v20
  %v38 = vmul.f32 %v37, %v36
  %v39 = vmul.f32 0.5, %v38
  %v40 = vsub.f32 1.5, %v39
  %v41 = vmul.f32 %v36, %v40
  %v42 = vmul.f32 %v20, %v41
  %vm43 = vcmp.eq.f32.partialorder %v20, inf
  %v44 = vsel %vm43, %v20, %v42
  %vm45 = vcmp.eq.f32.partialorder %v20, 0.0
  %v46 = vand.u32 %v20, 2147483648
  %v47 = vsel %vm45, %v46, %v44
  %v48 = vrsqrt.pop %v23
  %v49 = vmul.f32 %v48, %v23
  %v50 = vmul.f32 %v49, %v48
  %v51 = vmul.f32 0.5, %v50
  %v52 = vsub.f32 1.5, %v51
  %v53 = vmul.f32 %v48, %v52
  %v54 = vmul.f32 %v23, %v53
  %vm55 = vcmp.eq.f32.partialorder %v23, inf
  %v56 = vsel %vm55, %v23, %v54
  %vm57 = vcmp.eq.f32.partialorder %v23, 0.0
  %v58 = vand.u32 %v23, 2147483648
  %v59 = vsel %vm57, %v58, %v56
  %v60 = vmax.f32 %v35, 1e-15
  %v61 = vmax.f32 %v47, 1e-15
  %v62 = vmax.f32 %v59, 1e-15
  %v63 = vmax.f32 %v60, -0.9999999
  %v64 = vmax.f32 %v61, -0.9999999
  %v65 = vmax.f32 %v62, -0.9999999
  %v66 = vmin.f32 %v63, 0.9999999
  %v67 = vmin.f32 %v64, 0.9999999
  %v68 = vmin.f32 %v65, 0.9999999
  %v69 = vadd.f32 %v66, 1.0
  %v70 = vadd.f32 %v67, 1.0
  %v71 = vadd.f32 %v68, 1.0
  %v72 = vsub.f32 1.0, %v66
  %v73 = vsub.f32 1.0, %v67
  %v74 = vsub.f32 1.0, %v68
  %v75 = vrcp.pop %v72
  %v76 = vmul.f32 %v72, %v75
  %v77 = vsub.f32 1.0, %v76
  %v78 = vmul.f32 %v75, %v77
  %v79 = vadd.f32 %v75, %v78
  %vm80 = vweird.f32 %v72
  %vm81 = vweird.f32 %v75
  %vm82 = vmor %vm80, %vm81
  %v83 = vsel %vm82, %v75, %v79
  %v84 = vand.u32 2147483647, %v72
  %vm85 = vcmp.eq.f32.partialorder %v84, 8.507059e+37
  %v86 = vand.u32 %v72, 2147483648
  %v87 = vor.u32 1.1754944e-38, %v86
  %v88 = vsel %vm85, %v87, %v83
  %v89 = vmul.f32 %v69, %v88
  %v90 = vrcp.pop %v73
  %v91 = vmul.f32 %v73, %v90
  %v92 = vsub.f32 1.0, %v91
  %v93 = vmul.f32 %v90, %v92
  %v94 = vadd.f32 %v90, %v93
  %vm95 = vweird.f32 %v73
  %vm96 = vweird.f32 %v90
  %vm97 = vmor %vm95, %vm96
  %v98 = vsel %vm97, %v90, %v94
  %v99 = vand.u32 2147483647, %v73
  %vm100 = vcmp.eq.f32.partialorder %v99, 8.507059e+37
  %v101 = vand.u32 %v73, 2147483648
  %v102 = vor.u32 1.1754944e-38, %v101
  %v103 = vsel %vm100, %v102, %v98
  %v104 = vmul.f32 %v70, %v103
  %v105 = vrcp.pop %v74
  %v106 = vmul.f32 %v74, %v105
  %v107 = vsub.f32 1.0, %v106
  %v108 = vmul.f32 %v105, %v107
  %v109 = vadd.f32 %v105, %v108
  %vm110 = vweird.f32 %v74
  %vm111 = vweird.f32 %v105
  %vm112 = vmor %vm110, %vm111
  %v113 = vsel %vm112, %v105, %v109
  %v114 = vand.u32 2147483647, %v74
  %vm115 = vcmp.eq.f32.partialorder %v114, 8.507059e+37
  %v116 = vand.u32 %v74, 2147483648
  %v117 = vor.u32 1.1754944e-38, %v116
  %v118 = vsel %vm115, %v117, %v113
  %v119 = vmul.f32 %v71, %v118
  %v120 = vlog2.pop %v89
  %v121 = vmul.f32 %v120, 0.6931472
  %v122 = vlog2.pop %v104
  %v123 = vmul.f32 %v122, 0.6931472
  %v124 = vlog2.pop %v119
  %v125 = vmul.f32 %v124, 0.6931472
  %v126 = vmul.f32 %v121, 0.5
  %v127 = vmul.f32 %v123, 0.5
  %v128 = vmul.f32 %v125, 0.5
  %v129 = vrcp.pop %v60
  %v130 = vmul.f32 %v60, %v129
  %v131 = vsub.f32 1.0, %v130
  %v132 = vmul.f32 %v129, %v131
  %v133 = vadd.f32 %v129, %v132
  %vm134 = vweird.f32 %v60
  %vm135 = vweird.f32 %v129
  %vm136 = vmor %vm134, %vm135
  %v137 = vsel %vm136, %v129, %v133
  %v138 = vand.u32 2147483647, %v60
  %vm139 = vcmp.eq.f32.partialorder %v138, 8.507059e+37
  %v140 = vand.u32 %v60, 2147483648
  %v141 = vor.u32 1.1754944e-38, %v140
  %v142 = vsel %vm139, %v141, %v137
  %v143 = vmul.f32 %v126, %v142
  %v144 = vrcp.pop %v61
  %v145 = vmul.f32 %v61, %v144
  %v146 = vsub.f32 1.0, %v145
  %v147 = vmul.f32 %v144, %v146
  %v148 = vadd.f32 %v144, %v147
  %vm149 = vweird.f32 %v61
  %vm150 = vweird.f32 %v144
  %vm151 = vmor %vm149, %vm150
  %v152 = vsel %vm151, %v144, %v148
  %v153 = vand.u32 2147483647, %v61
  %vm154 = vcmp.eq.f32.partialorder %v153, 8.507059e+37
  %v155 = vand.u32 %v61, 2147483648
  %v156 = vor.u32 1.1754944e-38, %v155
  %v157 = vsel %vm154, %v156, %v152
  %v158 = vmul.f32 %v127, %v157
  %v159 = vrcp.pop %v62
  %v160 = vmul.f32 %v62, %v159
  %v161 = vsub.f32 1.0, %v160
  %v162 = vmul.f32 %v159, %v161
  %v163 = vadd.f32 %v159, %v162
  %vm164 = vweird.f32 %v62
  %vm165 = vweird.f32 %v159
  %vm166 = vmor %vm164, %vm165
  %v167 = vsel %vm166, %v159, %v163
  %v168 = vand.u32 2147483647, %v62
  %vm169 = vcmp.eq.f32.partialorder %v168, 8.507059e+37
  %v170 = vand.u32 %v62, 2147483648
  %v171 = vor.u32 1.1754944e-38, %v170
  %v172 = vsel %vm169, %v171, %v167
  %v173 = vmul.f32 %v128, %v172
  %v174 = vmul.f32 %v143, %v8
  %v175 = vmul.f32 %v158, %v9
  %v176 = vmul.f32 %v173, %v10
  %177 = vst.msk [vmem:[%s1] sm:$0xff] %vm14, %v174
  %178 = vst.msk [vmem:[%s1 + $0x8] sm:$0xff] %vm14, %v175
  %179 = vst.msk [vmem:[%s1 + $0x10] sm:$0xff] %vm14, %v176
  // Predicated region
  $region6: #{h2_graph_convolution_forward.8} parent=0 // pred_check
    _
  $region7: #{h2_graph_convolution_forward.8} parent=0 // pred_check_branch
    %181 = sbr.rel (0) target = $region9
  $region8: #{h2_graph_convolution_forward.8} parent=0 // pred_region
    _
  $region9: #{h2_graph_convolution_forward.8} parent=0 // pred_fallthru
    _
  // Predicated region
  $region10: #{h2_graph_convolution_forward.8} parent=0 // pred_check
    _
  $region11: #{h2_graph_convolution_forward.8} parent=0 // pred_check_branch
    %183 = sbr.rel (0) target = $region13
  $region12: #{h2_graph_convolution_forward.8} parent=0 // pred_region
    _
  $region13: #{h2_graph_convolution_forward.8} parent=0 // pred_fallthru
    _

// kernel: h2_graph_convolution_forward.9
$region0: #{h2_graph_convolution_forward.9}
  #allocation0 [shape = 'u32[]', space=smem, size = 0x4, offset = 0x4, fixed_abs, tag = 'smem constant byte address 0x4 - core index']
  #allocation1 [shape = 'u32[72,128]{1,0:T(1,128)}', space=vmem, size = 0x9000, scoped, tag = 'internal scratch']
  #allocation2 [shape = 'f32[8,32]{1,0:T(8,128)}', space=vmem, size = 0x1000, scoped, tag = 'scratch operand']
  %s0 = inlined_call_operand.vmem [shape: f32[24,32], index: 0, kind: input, shape index: {}]
  %s1 = inlined_call_operand.vmem [shape: f32[24,8], index: 1, kind: input, shape index: {}]
  %s2 = inlined_call_operand.vmem [shape: bf16[32,64], index: 2, kind: input, shape index: {}]
  %s3 = inlined_call_operand.vmem [shape: bf16[2,64], index: 3, kind: input, shape index: {}]
  %s4 = inlined_call_operand.vmem [shape: f32[8,1], index: 4, kind: input, shape index: {}]
  %s5 = inlined_call_operand.vmem [shape: f32[24,64], index: 5, kind: output, shape index: {0}]
  %s6 = inlined_call_operand.vmem [shape: f32[2,8], index: 6, kind: output, shape index: {1}]
  %7 = xla_tuple %s5, %s6
  %s8 = sld [smem:[#allocation0]]
  $region46: #{h2_graph_convolution_forward.9} parent=0
    _
  %s10 = ssub.s32 1, %s8
  %s11 = scalar_select 0, %s10, %s8
  // Predicated region
  $region2: #{h2_graph_convolution_forward.9} parent=0 // pred_check
    _
  $region3: #{h2_graph_convolution_forward.9} parent=0 // pred_check_branch
    %13 = sbr.rel (0) target = $region5
  $region4: #{h2_graph_convolution_forward.9} parent=0 // pred_region
    _
  $region5: #{h2_graph_convolution_forward.9} parent=0 // pred_fallthru
    _
  // Predicated region
  $region6: #{h2_graph_convolution_forward.9} parent=0 // pred_check
    _
  $region7: #{h2_graph_convolution_forward.9} parent=0 // pred_check_branch
    %15 = sbr.rel (0) target = $region9
  $region8: #{h2_graph_convolution_forward.9} parent=0 // pred_region
    _
  $region9: #{h2_graph_convolution_forward.9} parent=0 // pred_fallthru
    _
  // Predicated region
  $region10: #{h2_graph_convolution_forward.9} parent=0 // pred_check
    _
  $region11: #{h2_graph_convolution_forward.9} parent=0 // pred_check_branch
    %17 = sbr.rel (0) target = $region13
  $region12: #{h2_graph_convolution_forward.9} parent=0 // pred_region
    _
  $region13: #{h2_graph_convolution_forward.9} parent=0 // pred_fallthru
    _
  // Predicated region
  $region14: #{h2_graph_convolution_forward.9} parent=0 // pred_check
    _
  $region15: #{h2_graph_convolution_forward.9} parent=0 // pred_check_branch
    %19 = sbr.rel (0) target = $region17
  $region16: #{h2_graph_convolution_forward.9} parent=0 // pred_region
    _
  $region17: #{h2_graph_convolution_forward.9} parent=0 // pred_fallthru
    _
  // Predicated region
  $region18: #{h2_graph_convolution_forward.9} parent=0 // pred_check
    _
  $region19: #{h2_graph_convolution_forward.9} parent=0 // pred_check_branch
    %21 = sbr.rel (0) target = $region21
  $region20: #{h2_graph_convolution_forward.9} parent=0 // pred_region
    _
  $region21: #{h2_graph_convolution_forward.9} parent=0 // pred_fallthru
    _
  %p23 = scmp.eq.s32.totalorder 0, 0
  // Predicated region
  $region22: #{h2_graph_convolution_forward.9} parent=0 // pred_check
    %p24 = pneg %p23
  $region23: #{h2_graph_convolution_forward.9} parent=0 // pred_check_branch
    %26 = sbr.rel (%p24) target = $region25
  $region24: #{h2_graph_convolution_forward.9} parent=0 // pred_region
    %vm27 = vcmask 261120
    %28 = vst.msk [vmem:[#allocation2] sm:$0xff] %vm27, 0.0
  $region25: #{h2_graph_convolution_forward.9} parent=0 // pred_fallthru
    _
  %v29 = vld [vmem:[%s0] sm:$0xff]
  %v30 = vld [vmem:[%s0 + $0x8] sm:$0xff]
  %v31 = vld [vmem:[%s0 + $0x10] sm:$0xff]
  %v32 = vld [vmem:[%s2] sm:$0xf]
  %v33 = vld [vmem:[%s2 + $0x4] sm:$0xf]
  %v34 = vld [vmem:[%s2 + $0x8] sm:$0xf]
  %v35 = vld [vmem:[%s2 + $0xc] sm:$0xf]
  %v36 = vpack.c.bf16 %v30, %v29
  %v37 = vpack.c.bf16 %v31, %v31
  %v42 = vunpack.c.l.b16 %v32
  %v43 = vunpack.c.l.b16 %v33
  %v44 = vunpack.c.l.b16 %v34
  %v45 = vunpack.c.l.b16 %v35
  %v46 = vpack.c.b16 %v43, %v42
  %v47 = vpack.c.b16 %v45, %v44
  %vm50 = vcmask 261120
  %v52 = vsel %vm50, %v36, 0
  %v55 = vsel %vm50, %v37, 0
  %57 = vmatpush.bf16.msra.mxu0 0
  %58 = vmatpush.bf16.msra.mxu0 0
  %59 = vmatpush.bf16.msra.mxu0 0
  %60 = vmatpush.bf16.msra.mxu0 0
  %61 = vmatpush.bf16.msra.mxu0 0
  %62 = vmatpush.bf16.msra.mxu0 0
  %63 = vmatpush.bf16.msra.mxu0 %v47
  %64 = vmatpush.bf16.msra.mxu0 %v46
  %65 = vmatmul.bf16.gmra.mxu0 %v52
  %v66 = vpop.f32.mrf.mxu0
  %v67 = vadd.f32 0.0, %v66
  %v68 = vpop.f32.mrf.mxu0
  %v69 = vadd.f32 0.0, %v68
  %70 = vmatmul.bf16.gmra.mxu0 %v55
  %v71 = vpop.f32.mrf.mxu0
  %v72 = vadd.f32 0.0, %v71
  %v73 = vpop.f32.mrf.mxu0
  %74 = vdwg.mxu0
  %vm75 = vcmask 523264
  %76 = vst.msk [vmem:[%s5] sm:$0xff] %vm75, %v67
  %77 = vst.msk [vmem:[%s5 + $0x8] sm:$0xff] %vm75, %v69
  %78 = vst.msk [vmem:[%s5 + $0x10] sm:$0xff] %vm75, %v72
  %v79 = vld [vmem:[#allocation2] sm:$0xff]
  %v80 = vld [vmem:[%s1] sm:$0xff]
  %v81 = vld [vmem:[%s1 + $0x8] sm:$0xff]
  %v82 = vld [vmem:[%s1 + $0x10] sm:$0xff]
  %v83 = vpack.c.bf16 %v81, %v80
  %v84 = vpack.c.bf16 %v82, %v82
  %85 = vxpose.xlu0.c.b16.start [1/8] %v83, 128
  %86 = vxpose.xlu0.c.b16.cont [2/8] %v84, 128
  %87 = vxpose.xlu0.c.b16.cont [3/8] 0, 128
  %88 = vxpose.xlu0.c.b16.cont [4/8] 0, 128
  %89 = vxpose.xlu0.c.b16.cont [5/8] 0, 128
  %90 = vxpose.xlu0.c.b16.cont [6/8] 0, 128
  %91 = vxpose.xlu0.c.b16.cont [7/8] 0, 128
  %92 = vxpose.xlu0.c.b16.end [8/8] 0, 128
  %v93 = vpop.trf.xlu0
  %v94 = vpop.trf.xlu0
  %v95 = vpop.trf.xlu0
  %v96 = vpop.trf.xlu0
  %v97 = vpop.trf.xlu0
  %v98 = vpop.trf.xlu0
  %v99 = vpop.trf.xlu0
  %v100 = vpop.trf.xlu0
  %vm101 = vcmask 195584
  %v103 = vsel %vm101, %v93, 0
  %vm105 = vcmask 1043456
  %v106 = vsel %vm105, %v37, 0
  %108 = vmatpush.bf16.msra.mxu0 0
  %109 = vmatpush.bf16.msra.mxu0 0
  %110 = vmatpush.bf16.msra.mxu0 0
  %111 = vmatpush.bf16.msra.mxu0 0
  %112 = vmatpush.bf16.msra.mxu0 0
  %113 = vmatpush.bf16.msra.mxu0 0
  %114 = vmatpush.bf16.msra.mxu0 %v106
  %115 = vmatpush.bf16.msra.mxu0 %v36
  %116 = vmatmul.bf16.gmra.mxu0 %v103
  %v117 = vpop.f32.mrf.mxu0
  %v118 = vadd.f32 0.0, %v117
  %v119 = vpop.f32.mrf.mxu0
  %120 = vdwg.mxu0
  %v121 = vadd.f32 %v79, %v118
  %122 = vst.msk [vmem:[#allocation2] sm:$0xff] %vm50, %v121
  // Predicated region
  $region26: #{h2_graph_convolution_forward.9} parent=0 // pred_check
    %p123 = pneg %p23
  $region27: #{h2_graph_convolution_forward.9} parent=0 // pred_check_branch
    %125 = sbr.rel (%p123) target = $region29
  $region28: #{h2_graph_convolution_forward.9} parent=0 // pred_region
    %v126 = vld [vmem:[#allocation2] sm:$0xff]
    %v127 = vld [vmem:[%s4] sm:$0xff]
    %129 = vset.pattern.permute.xlu0 0
    %130 = vperm.xlu0 %129, %v127
    %v131 = vpop.permute.xlu0 %130
    %v133 = vmul.f32 %v126, %v131
    %v134 = vpack.c.bf16 %v133, %v133
    %v136 = vsel %vm50, %v134, 0
    %138 = vmatpush.bf16.msra.mxu0 0
    %139 = vmatpush.bf16.msra.mxu0 0
    %140 = vmatpush.bf16.msra.mxu0 0
    %141 = vmatpush.bf16.msra.mxu0 0
    %142 = vmatpush.bf16.msra.mxu0 0
    %143 = vmatpush.bf16.msra.mxu0 0
    %144 = vmatpush.bf16.msra.mxu0 %v47
    %145 = vmatpush.bf16.msra.mxu0 %v46
    %146 = vmatmul.bf16.gmra.mxu0 %v136
    %v147 = vpop.f32.mrf.mxu0
    %v148 = vadd.f32 0.0, %v147
    %v149 = vpop.f32.mrf.mxu0
    %150 = vdwg.mxu0
    %v151 = vld [vmem:[%s3] sm:$0x1]
    %v152 = vpack.c.bf16 %v148, %v148
    %v154 = vsel %vm75, %v151, 0
    %v157 = vsel %vm75, %v152, 0
    %159 = vmatpush.bf16.xpose.msra.mxu0 0
    %160 = vmatpush.bf16.xpose.msra.mxu0 0
    %161 = vmatpush.bf16.xpose.msra.mxu0 0
    %162 = vmatpush.bf16.xpose.msra.mxu0 0
    %163 = vmatpush.bf16.xpose.msra.mxu0 0
    %164 = vmatpush.bf16.xpose.msra.mxu0 0
    %165 = vmatpush.bf16.xpose.msra.mxu0 0
    %166 = vmatpush.bf16.xpose.msra.mxu0 %v157
    %167 = vmatmul.bf16.gmra.mxu0 %v154
    %v168 = vpop.f32.mrf.mxu0
    %v169 = vadd.f32 0.0, %v168
    %v170 = vpop.f32.mrf.mxu0
    %171 = vdwg.mxu0
    %vm172 = vcmask 58368
    %173 = vst.msk [vmem:[%s6] sm:$0x3] %vm172, %v169
  $region29: #{h2_graph_convolution_forward.9} parent=0 // pred_fallthru
    _
  // Predicated region
  $region30: #{h2_graph_convolution_forward.9} parent=0 // pred_check
    _
  $region31: #{h2_graph_convolution_forward.9} parent=0 // pred_check_branch
    %175 = sbr.rel (0) target = $region33
  $region32: #{h2_graph_convolution_forward.9} parent=0 // pred_region
    _
  $region33: #{h2_graph_convolution_forward.9} parent=0 // pred_fallthru
    _
  // Predicated region
  $region34: #{h2_graph_convolution_forward.9} parent=0 // pred_check
    _
  $region35: #{h2_graph_convolution_forward.9} parent=0 // pred_check_branch
    %177 = sbr.rel (0) target = $region37
  $region36: #{h2_graph_convolution_forward.9} parent=0 // pred_region
    _
  $region37: #{h2_graph_convolution_forward.9} parent=0 // pred_fallthru
    _
  // Predicated region
  $region38: #{h2_graph_convolution_forward.9} parent=0 // pred_check
    _
  $region39: #{h2_graph_convolution_forward.9} parent=0 // pred_check_branch
    %179 = sbr.rel (0) target = $region41
  $region40: #{h2_graph_convolution_forward.9} parent=0 // pred_region
    _
  $region41: #{h2_graph_convolution_forward.9} parent=0 // pred_fallthru
    _
  // Predicated region
  $region42: #{h2_graph_convolution_forward.9} parent=0 // pred_check
    _
  $region43: #{h2_graph_convolution_forward.9} parent=0 // pred_check_branch
    %181 = sbr.rel (0) target = $region45
  $region44: #{h2_graph_convolution_forward.9} parent=0 // pred_region
    _
  $region45: #{h2_graph_convolution_forward.9} parent=0 // pred_fallthru
    _

// kernel: h2_graph_convolution_forward.10
$region0: #{h2_graph_convolution_forward.10}
  #allocation0 [shape = 'u32[]', space=smem, size = 0x4, offset = 0x4, fixed_abs, tag = 'smem constant byte address 0x4 - core index']
  #allocation1 [shape = 'u32[72,128]{1,0:T(1,128)}', space=vmem, size = 0x9000, scoped, tag = 'internal scratch']
  #allocation2 [shape = 'f32[8,64]{1,0:T(8,128)}', space=vmem, size = 0x1000, scoped, tag = 'scratch operand']
  %s0 = inlined_call_operand.vmem [shape: f32[24,64], index: 0, kind: input, shape index: {}]
  %s1 = inlined_call_operand.vmem [shape: f32[24,8], index: 1, kind: input, shape index: {}]
  %s2 = inlined_call_operand.vmem [shape: f32[24,1], index: 2, kind: input, shape index: {}]
  %s3 = inlined_call_operand.vmem [shape: f32[2,32], index: 3, kind: input, shape index: {}]
  %s4 = inlined_call_operand.vmem [shape: f32[2,8], index: 4, kind: input, shape index: {}]
  %s5 = inlined_call_operand.vmem [shape: f32[8,1], index: 5, kind: input, shape index: {}]
  %s6 = inlined_call_operand.vmem [shape: f32[8,64], index: 6, kind: output, shape index: {}]
  %s7 = sld [smem:[#allocation0]]
  $region42: #{h2_graph_convolution_forward.10} parent=0
    _
  %s9 = ssub.s32 1, %s7
  %s10 = scalar_select 0, %s9, %s7
  // Predicated region
  $region2: #{h2_graph_convolution_forward.10} parent=0 // pred_check
    _
  $region3: #{h2_graph_convolution_forward.10} parent=0 // pred_check_branch
    %12 = sbr.rel (0) target = $region5
  $region4: #{h2_graph_convolution_forward.10} parent=0 // pred_region
    _
  $region5: #{h2_graph_convolution_forward.10} parent=0 // pred_fallthru
    _
  // Predicated region
  $region6: #{h2_graph_convolution_forward.10} parent=0 // pred_check
    _
  $region7: #{h2_graph_convolution_forward.10} parent=0 // pred_check_branch
    %14 = sbr.rel (0) target = $region9
  $region8: #{h2_graph_convolution_forward.10} parent=0 // pred_region
    _
  $region9: #{h2_graph_convolution_forward.10} parent=0 // pred_fallthru
    _
  // Predicated region
  $region10: #{h2_graph_convolution_forward.10} parent=0 // pred_check
    _
  $region11: #{h2_graph_convolution_forward.10} parent=0 // pred_check_branch
    %16 = sbr.rel (0) target = $region13
  $region12: #{h2_graph_convolution_forward.10} parent=0 // pred_region
    _
  $region13: #{h2_graph_convolution_forward.10} parent=0 // pred_fallthru
    _
  // Predicated region
  $region14: #{h2_graph_convolution_forward.10} parent=0 // pred_check
    _
  $region15: #{h2_graph_convolution_forward.10} parent=0 // pred_check_branch
    %18 = sbr.rel (0) target = $region17
  $region16: #{h2_graph_convolution_forward.10} parent=0 // pred_region
    _
  $region17: #{h2_graph_convolution_forward.10} parent=0 // pred_fallthru
    _
  // Predicated region
  $region18: #{h2_graph_convolution_forward.10} parent=0 // pred_check
    _
  $region19: #{h2_graph_convolution_forward.10} parent=0 // pred_check_branch
    %20 = sbr.rel (0) target = $region21
  $region20: #{h2_graph_convolution_forward.10} parent=0 // pred_region
    _
  $region21: #{h2_graph_convolution_forward.10} parent=0 // pred_fallthru
    _
  // Predicated region
  $region22: #{h2_graph_convolution_forward.10} parent=0 // pred_check
    _
  $region23: #{h2_graph_convolution_forward.10} parent=0 // pred_check_branch
    %22 = sbr.rel (0) target = $region25
  $region24: #{h2_graph_convolution_forward.10} parent=0 // pred_region
    _
  $region25: #{h2_graph_convolution_forward.10} parent=0 // pred_fallthru
    _
  %p24 = scmp.eq.s32.totalorder 0, 0
  // Predicated region
  $region26: #{h2_graph_convolution_forward.10} parent=0 // pred_check
    %p25 = pneg %p24
  $region27: #{h2_graph_convolution_forward.10} parent=0 // pred_check_branch
    %27 = sbr.rel (%p25) target = $region29
  $region28: #{h2_graph_convolution_forward.10} parent=0 // pred_region
    %vm28 = vcmask 523264
    %29 = vst.msk [vmem:[#allocation2] sm:$0xff] %vm28, 0.0
  $region29: #{h2_graph_convolution_forward.10} parent=0 // pred_fallthru
    _
  %v30 = vld [vmem:[%s0] sm:$0xff]
  %v31 = vld [vmem:[%s0 + $0x8] sm:$0xff]
  %v32 = vld [vmem:[%s0 + $0x10] sm:$0xff]
  %v33 = vld [vmem:[%s1] sm:$0xff]
  %v34 = vld [vmem:[%s1 + $0x8] sm:$0xff]
  %v35 = vld [vmem:[%s1 + $0x10] sm:$0xff]
  %v36 = vld [vmem:[%s2] sm:$0xff]
  %v37 = vld [vmem:[%s2 + $0x8] sm:$0xff]
  %v38 = vld [vmem:[%s2 + $0x10] sm:$0xff]
  %v39 = vld [vmem:[%s3] sm:$0x3]
  %v40 = vld [vmem:[%s4] sm:$0x3]
  %v41 = vperm.slane %v39, 0
  %v42 = vmul.f32 %v30, %v41
  %v43 = vmul.f32 %v31, %v41
  %v44 = vmul.f32 %v32, %v41
  %vm45 = vcmask 261120
  %v46 = vsel %vm45, %v42, 0.0
  %47 = vadd.xlane.f32.xlu0 %v46
  %v48 = vpop.xlane.xlu0 %47
  %v49 = vsel %vm45, %v43, 0.0
  %50 = vadd.xlane.f32.xlu0 %v49
  %v51 = vpop.xlane.xlu0 %50
  %v52 = vsel %vm45, %v44, 0.0
  %53 = vadd.xlane.f32.xlu0 %v52
  %v54 = vpop.xlane.xlu0 %53
  %v55 = vperm.slane %v40, 0
  %v56 = vadd.f32 %v48, %v55
  %v57 = vadd.f32 %v51, %v55
  %v58 = vadd.f32 %v54, %v55
  %vm59 = vcmp.gt.f32.partialorder %v56, 0.0
  %vm60 = vcmp.gt.f32.partialorder %v57, 0.0
  %vm61 = vcmp.gt.f32.partialorder %v58, 0.0
  %v62 = vmul.f32 %v56, 0.2
  %v63 = vmul.f32 %v57, 0.2
  %v64 = vmul.f32 %v58, 0.2
  %v65 = vsel %vm59, %v56, %v62
  %v66 = vsel %vm60, %v57, %v63
  %v67 = vsel %vm61, %v58, %v64
  %v68 = vadd.f32 %v65, %v33
  %v69 = vadd.f32 %v66, %v34
  %v70 = vadd.f32 %v67, %v35
  %vm71 = vcmask 64512
  %v72 = vsel %vm71, %v68, -inf
  %73 = vmax.xlane.f32.xlu0 %v72
  %v74 = vpop.xlane.xlu0 %73
  %v75 = vsel %vm71, %v69, -inf
  %76 = vmax.xlane.f32.xlu0 %v75
  %v77 = vpop.xlane.xlu0 %76
  %v78 = vsel %vm71, %v70, -inf
  %79 = vmax.xlane.f32.xlu0 %v78
  %v80 = vpop.xlane.xlu0 %79
  %v81 = vsub.f32 %v68, %v74
  %v82 = vsub.f32 %v69, %v77
  %v83 = vsub.f32 %v70, %v80
  %v84 = vmul.f32 %v81, 1.442695
  %v85 = vpow.pop %v84
  %v86 = vmul.f32 %v82, 1.442695
  %v87 = vpow.pop %v86
  %v88 = vmul.f32 %v83, 1.442695
  %v89 = vpow.pop %v88
  %v90 = vsel %vm71, %v85, 0.0
  %91 = vadd.xlane.f32.xlu0 %v90
  %v92 = vpop.xlane.xlu0 %91
  %v93 = vsel %vm71, %v87, 0.0
  %94 = vadd.xlane.f32.xlu0 %v93
  %v95 = vpop.xlane.xlu0 %94
  %v96 = vsel %vm71, %v89, 0.0
  %97 = vadd.xlane.f32.xlu0 %v96
  %v98 = vpop.xlane.xlu0 %97
  %v99 = vrcp.pop %v92
  %v100 = vrcp.pop %v95
  %v101 = vrcp.pop %v98
  %v102 = vmul.f32 %v36, %v99
  %v103 = vmul.f32 %v37, %v100
  %v104 = vmul.f32 %v38, %v101
  %106 = vset.pattern.permute.xlu0 0
  %107 = vperm.xlu0 %106, %v102
  %v108 = vpop.permute.xlu0 %107
  %111 = vset.pattern.permute.xlu0 0
  %112 = vperm.xlu0 %111, %v103
  %v113 = vpop.permute.xlu0 %112
  %116 = vset.pattern.permute.xlu0 0
  %117 = vperm.xlu0 %116, %v104
  %v118 = vpop.permute.xlu0 %117
  %v120 = vmul.f32 %v85, %v108
  %v121 = vmul.f32 %v87, %v113
  %v122 = vmul.f32 %v89, %v118
  %v123 = vpack.c.bf16 %v121, %v120
  %v124 = vpack.c.bf16 %v122, %v122
  %v125 = vpack.c.bf16 %v31, %v30
  %v126 = vpack.c.bf16 %v32, %v32
  %127 = vxpose.xlu0.c.b16.start [1/8] %v123, 128
  %128 = vxpose.xlu0.c.b16.cont [2/8] %v124, 128
  %129 = vxpose.xlu0.c.b16.cont [3/8] 0, 128
  %130 = vxpose.xlu0.c.b16.cont [4/8] 0, 128
  %131 = vxpose.xlu0.c.b16.cont [5/8] 0, 128
  %132 = vxpose.xlu0.c.b16.cont [6/8] 0, 128
  %133 = vxpose.xlu0.c.b16.cont [7/8] 0, 128
  %134 = vxpose.xlu0.c.b16.end [8/8] 0, 128
  %v135 = vpop.trf.xlu0
  %v136 = vpop.trf.xlu0
  %v137 = vpop.trf.xlu0
  %v138 = vpop.trf.xlu0
  %v139 = vpop.trf.xlu0
  %v140 = vpop.trf.xlu0
  %v141 = vpop.trf.xlu0
  %v142 = vpop.trf.xlu0
  %vm143 = vcmask 195584
  %v145 = vsel %vm143, %v135, 0
  %vm147 = vcmask 1043456
  %v149 = vsel %vm147, %v126, 0
  %151 = vmatpush.bf16.msra.mxu0 0
  %152 = vmatpush.bf16.msra.mxu0 0
  %153 = vmatpush.bf16.msra.mxu0 0
  %154 = vmatpush.bf16.msra.mxu0 0
  %155 = vmatpush.bf16.msra.mxu0 0
  %156 = vmatpush.bf16.msra.mxu0 0
  %157 = vmatpush.bf16.msra.mxu0 %v149
  %158 = vmatpush.bf16.msra.mxu0 %v125
  %159 = vmatmul.bf16.gmra.mxu0 %v145
  %v160 = vpop.f32.mrf.mxu0
  %v161 = vadd.f32 0.0, %v160
  %v162 = vpop.f32.mrf.mxu0
  %163 = vdwg.mxu0
  %v164 = vperm.slane %v39, 1
  %166 = vrot.lane.b32.xlu0 %v164, 32
  %v167 = vpop.permute.xlu0 %166
  %v169 = vmul.f32 %v30, %v167
  %v170 = vmul.f32 %v31, %v167
  %v171 = vmul.f32 %v32, %v167
  %175 = vrot.lane.b32.xlu0 %v169, 96
  %v176 = vpop.permute.xlu0 %175
  %177 = vrot.lane.b32.xlu0 %v170, 96
  %v178 = vpop.permute.xlu0 %177
  %179 = vrot.lane.b32.xlu0 %v171, 96
  %v180 = vpop.permute.xlu0 %179
  %v184 = vsel %vm45, %v176, 0.0
  %185 = vadd.xlane.f32.xlu0 %v184
  %v186 = vpop.xlane.xlu0 %185
  %v187 = vsel %vm45, %v178, 0.0
  %188 = vadd.xlane.f32.xlu0 %v187
  %v189 = vpop.xlane.xlu0 %188
  %v190 = vsel %vm45, %v180, 0.0
  %191 = vadd.xlane.f32.xlu0 %v190
  %v192 = vpop.xlane.xlu0 %191
  %v193 = vperm.slane %v40, 1
  %v194 = vadd.f32 %v186, %v193
  %v195 = vadd.f32 %v189, %v193
  %v196 = vadd.f32 %v192, %v193
  %vm197 = vcmp.gt.f32.partialorder %v194, 0.0
  %vm198 = vcmp.gt.f32.partialorder %v195, 0.0
  %vm199 = vcmp.gt.f32.partialorder %v196, 0.0
  %v200 = vmul.f32 %v194, 0.2
  %v201 = vmul.f32 %v195, 0.2
  %v202 = vmul.f32 %v196, 0.2
  %v203 = vsel %vm197, %v194, %v200
  %v204 = vsel %vm198, %v195, %v201
  %v205 = vsel %vm199, %v196, %v202
  %v206 = vadd.f32 %v203, %v33
  %v207 = vadd.f32 %v204, %v34
  %v208 = vadd.f32 %v205, %v35
  %v209 = vsel %vm71, %v206, -inf
  %210 = vmax.xlane.f32.xlu0 %v209
  %v211 = vpop.xlane.xlu0 %210
  %v212 = vsel %vm71, %v207, -inf
  %213 = vmax.xlane.f32.xlu0 %v212
  %v214 = vpop.xlane.xlu0 %213
  %v215 = vsel %vm71, %v208, -inf
  %216 = vmax.xlane.f32.xlu0 %v215
  %v217 = vpop.xlane.xlu0 %216
  %v218 = vsub.f32 %v206, %v211
  %v219 = vsub.f32 %v207, %v214
  %v220 = vsub.f32 %v208, %v217
  %v221 = vmul.f32 %v218, 1.442695
  %v222 = vpow.pop %v221
  %v223 = vmul.f32 %v219, 1.442695
  %v224 = vpow.pop %v223
  %v225 = vmul.f32 %v220, 1.442695
  %v226 = vpow.pop %v225
  %v227 = vsel %vm71, %v222, 0.0
  %228 = vadd.xlane.f32.xlu0 %v227
  %v229 = vpop.xlane.xlu0 %228
  %v230 = vsel %vm71, %v224, 0.0
  %231 = vadd.xlane.f32.xlu0 %v230
  %v232 = vpop.xlane.xlu0 %231
  %v233 = vsel %vm71, %v226, 0.0
  %234 = vadd.xlane.f32.xlu0 %v233
  %v235 = vpop.xlane.xlu0 %234
  %v236 = vrcp.pop %v229
  %v237 = vrcp.pop %v232
  %v238 = vrcp.pop %v235
  %v239 = vmul.f32 %v36, %v236
  %v240 = vmul.f32 %v37, %v237
  %v241 = vmul.f32 %v38, %v238
  %243 = vset.pattern.permute.xlu0 0
  %244 = vperm.xlu0 %243, %v239
  %v245 = vpop.permute.xlu0 %244
  %248 = vset.pattern.permute.xlu0 0
  %249 = vperm.xlu0 %248, %v240
  %v250 = vpop.permute.xlu0 %249
  %253 = vset.pattern.permute.xlu0 0
  %254 = vperm.xlu0 %253, %v241
  %v255 = vpop.permute.xlu0 %254
  %v257 = vmul.f32 %v222, %v245
  %v258 = vmul.f32 %v224, %v250
  %v259 = vmul.f32 %v226, %v255
  %v260 = vpack.c.bf16 %v258, %v257
  %v261 = vpack.c.bf16 %v259, %v259
  %262 = vxpose.xlu0.c.b16.start [1/8] %v260, 128
  %263 = vxpose.xlu0.c.b16.cont [2/8] %v261, 128
  %264 = vxpose.xlu0.c.b16.cont [3/8] 0, 128
  %265 = vxpose.xlu0.c.b16.cont [4/8] 0, 128
  %266 = vxpose.xlu0.c.b16.cont [5/8] 0, 128
  %267 = vxpose.xlu0.c.b16.cont [6/8] 0, 128
  %268 = vxpose.xlu0.c.b16.cont [7/8] 0, 128
  %269 = vxpose.xlu0.c.b16.end [8/8] 0, 128
  %v270 = vpop.trf.xlu0
  %v271 = vpop.trf.xlu0
  %v272 = vpop.trf.xlu0
  %v273 = vpop.trf.xlu0
  %v274 = vpop.trf.xlu0
  %v275 = vpop.trf.xlu0
  %v276 = vpop.trf.xlu0
  %v277 = vpop.trf.xlu0
  %280 = vrot.lane.b32.xlu0 %v125, 96
  %v281 = vpop.permute.xlu0 %280
  %282 = vrot.lane.b32.xlu0 %v126, 96
  %v283 = vpop.permute.xlu0 %282
  %v286 = vsel %vm143, %v270, 0
  %v289 = vsel %vm147, %v283, 0
  %291 = vmatpush.bf16.msra.mxu0 0
  %292 = vmatpush.bf16.msra.mxu0 0
  %293 = vmatpush.bf16.msra.mxu0 0
  %294 = vmatpush.bf16.msra.mxu0 0
  %295 = vmatpush.bf16.msra.mxu0 0
  %296 = vmatpush.bf16.msra.mxu0 0
  %297 = vmatpush.bf16.msra.mxu0 %v289
  %298 = vmatpush.bf16.msra.mxu0 %v281
  %299 = vmatmul.bf16.gmra.mxu0 %v286
  %v300 = vpop.f32.mrf.mxu0
  %v301 = vadd.f32 0.0, %v300
  %v302 = vpop.f32.mrf.mxu0
  %303 = vdwg.mxu0
  %v304 = vld [vmem:[#allocation2] sm:$0xff]
  %306 = vrot.lane.b32.xlu0 %v301, 32
  %v307 = vpop.permute.xlu0 %306
  %v309 = vsel %vm45, %v161, %v307
  %v310 = vadd.f32 %v304, %v309
  %vm311 = vcmask 523264
  %312 = vst.msk [vmem:[#allocation2] sm:$0xff] %vm311, %v310
  // Predicated region
  $region30: #{h2_graph_convolution_forward.10} parent=0 // pred_check
    %p313 = pneg %p24
  $region31: #{h2_graph_convolution_forward.10} parent=0 // pred_check_branch
    %315 = sbr.rel (%p313) target = $region33
  $region32: #{h2_graph_convolution_forward.10} parent=0 // pred_region
    %v316 = vld [vmem:[#allocation2] sm:$0xff]
    %v317 = vld [vmem:[%s5] sm:$0xff]
    %319 = vset.pattern.permute.xlu0 0
    %320 = vperm.xlu0 %319, %v317
    %v321 = vpop.permute.xlu0 %320
    %v323 = vmul.f32 %v316, %v321
    %324 = vst.msk [vmem:[%s6] sm:$0xff] %vm311, %v323
  $region33: #{h2_graph_convolution_forward.10} parent=0 // pred_fallthru
    _
  // Predicated region
  $region34: #{h2_graph_convolution_forward.10} parent=0 // pred_check
    _
  $region35: #{h2_graph_convolution_forward.10} parent=0 // pred_check_branch
    %326 = sbr.rel (0) target = $region37
  $region36: #{h2_graph_convolution_forward.10} parent=0 // pred_region
    _
  $region37: #{h2_graph_convolution_forward.10} parent=0 // pred_fallthru
    _
  // Predicated region
  $region38: #{h2_graph_convolution_forward.10} parent=0 // pred_check
    _
  $region39: #{h2_graph_convolution_forward.10} parent=0 // pred_check_branch
    %328 = sbr.rel (0) target = $region41
  $region40: #{h2_graph_convolution_forward.10} parent=0 // pred_region
    _
  $region41: #{h2_graph_convolution_forward.10} parent=0 // pred_fallthru
    _

// kernel: h2_graph_convolution_forward.11
$region0: #{h2_graph_convolution_forward.11}
  #allocation0 [shape = 'u32[]', space=smem, size = 0x4, offset = 0x4, fixed_abs, tag = 'smem constant byte address 0x4 - core index']
  #allocation1 [shape = 'u32[72,128]{1,0:T(1,128)}', space=vmem, size = 0x9000, scoped, tag = 'internal scratch']
  %s0 = inlined_call_operand.vmem [shape: f32[24,64], index: 0, kind: input, shape index: {}]
  %s1 = inlined_call_operand.vmem [shape: f32[24,8], index: 1, kind: input, shape index: {}]
  %s2 = inlined_call_operand.vmem [shape: f32[24,1], index: 2, kind: input, shape index: {}]
  %s3 = inlined_call_operand.vmem [shape: f32[24,1], index: 3, kind: input, shape index: {}]
  %s4 = inlined_call_operand.vmem [shape: f32[2,32], index: 4, kind: input, shape index: {}]
  %s5 = inlined_call_operand.vmem [shape: f32[2,8], index: 5, kind: input, shape index: {}]
  %s6 = inlined_call_operand.vmem [shape: f32[8,64], index: 6, kind: input, shape index: {}]
  %s7 = inlined_call_operand.vmem [shape: f32[1,32], index: 7, kind: input, shape index: {}]
  %s8 = inlined_call_operand.vmem [shape: f32[24,32], index: 8, kind: output, shape index: {}]
  %s9 = sld [smem:[#allocation0]]
  $region42: #{h2_graph_convolution_forward.11} parent=0
    _
  %s11 = ssub.s32 1, %s9
  %s12 = scalar_select 0, %s11, %s9
  // Predicated region
  $region2: #{h2_graph_convolution_forward.11} parent=0 // pred_check
    _
  $region3: #{h2_graph_convolution_forward.11} parent=0 // pred_check_branch
    %14 = sbr.rel (0) target = $region5
  $region4: #{h2_graph_convolution_forward.11} parent=0 // pred_region
    _
  $region5: #{h2_graph_convolution_forward.11} parent=0 // pred_fallthru
    _
  // Predicated region
  $region6: #{h2_graph_convolution_forward.11} parent=0 // pred_check
    _
  $region7: #{h2_graph_convolution_forward.11} parent=0 // pred_check_branch
    %16 = sbr.rel (0) target = $region9
  $region8: #{h2_graph_convolution_forward.11} parent=0 // pred_region
    _
  $region9: #{h2_graph_convolution_forward.11} parent=0 // pred_fallthru
    _
  // Predicated region
  $region10: #{h2_graph_convolution_forward.11} parent=0 // pred_check
    _
  $region11: #{h2_graph_convolution_forward.11} parent=0 // pred_check_branch
    %18 = sbr.rel (0) target = $region13
  $region12: #{h2_graph_convolution_forward.11} parent=0 // pred_region
    _
  $region13: #{h2_graph_convolution_forward.11} parent=0 // pred_fallthru
    _
  // Predicated region
  $region14: #{h2_graph_convolution_forward.11} parent=0 // pred_check
    _
  $region15: #{h2_graph_convolution_forward.11} parent=0 // pred_check_branch
    %20 = sbr.rel (0) target = $region17
  $region16: #{h2_graph_convolution_forward.11} parent=0 // pred_region
    _
  $region17: #{h2_graph_convolution_forward.11} parent=0 // pred_fallthru
    _
  // Predicated region
  $region18: #{h2_graph_convolution_forward.11} parent=0 // pred_check
    _
  $region19: #{h2_graph_convolution_forward.11} parent=0 // pred_check_branch
    %22 = sbr.rel (0) target = $region21
  $region20: #{h2_graph_convolution_forward.11} parent=0 // pred_region
    _
  $region21: #{h2_graph_convolution_forward.11} parent=0 // pred_fallthru
    _
  // Predicated region
  $region22: #{h2_graph_convolution_forward.11} parent=0 // pred_check
    _
  $region23: #{h2_graph_convolution_forward.11} parent=0 // pred_check_branch
    %24 = sbr.rel (0) target = $region25
  $region24: #{h2_graph_convolution_forward.11} parent=0 // pred_region
    _
  $region25: #{h2_graph_convolution_forward.11} parent=0 // pred_fallthru
    _
  // Predicated region
  $region26: #{h2_graph_convolution_forward.11} parent=0 // pred_check
    _
  $region27: #{h2_graph_convolution_forward.11} parent=0 // pred_check_branch
    %26 = sbr.rel (0) target = $region29
  $region28: #{h2_graph_convolution_forward.11} parent=0 // pred_region
    _
  $region29: #{h2_graph_convolution_forward.11} parent=0 // pred_fallthru
    _
  // Predicated region
  $region30: #{h2_graph_convolution_forward.11} parent=0 // pred_check
    _
  $region31: #{h2_graph_convolution_forward.11} parent=0 // pred_check_branch
    %28 = sbr.rel (0) target = $region33
  $region32: #{h2_graph_convolution_forward.11} parent=0 // pred_region
    _
  $region33: #{h2_graph_convolution_forward.11} parent=0 // pred_fallthru
    _
  %v30 = vld [vmem:[%s0] sm:$0xff]
  %v31 = vld [vmem:[%s0 + $0x8] sm:$0xff]
  %v32 = vld [vmem:[%s0 + $0x10] sm:$0xff]
  %v33 = vld [vmem:[%s1] sm:$0xff]
  %v34 = vld [vmem:[%s1 + $0x8] sm:$0xff]
  %v35 = vld [vmem:[%s1 + $0x10] sm:$0xff]
  %v36 = vld [vmem:[%s2] sm:$0xff]
  %v37 = vld [vmem:[%s2 + $0x8] sm:$0xff]
  %v38 = vld [vmem:[%s2 + $0x10] sm:$0xff]
  %v39 = vld [vmem:[%s4] sm:$0x3]
  %v40 = vld [vmem:[%s5] sm:$0x3]
  %v41 = vld [vmem:[%s6] sm:$0xff]
  %v42 = vperm.slane %v39, 0
  %v43 = vmul.f32 %v30, %v42
  %v44 = vmul.f32 %v31, %v42
  %v45 = vmul.f32 %v32, %v42
  %vm46 = vcmask 261120
  %v47 = vsel %vm46, %v43, 0.0
  %48 = vadd.xlane.f32.xlu0 %v47
  %v49 = vpop.xlane.xlu0 %48
  %v50 = vsel %vm46, %v44, 0.0
  %51 = vadd.xlane.f32.xlu0 %v50
  %v52 = vpop.xlane.xlu0 %51
  %v53 = vsel %vm46, %v45, 0.0
  %54 = vadd.xlane.f32.xlu0 %v53
  %v55 = vpop.xlane.xlu0 %54
  %v56 = vperm.slane %v40, 0
  %v57 = vadd.f32 %v49, %v56
  %v58 = vadd.f32 %v52, %v56
  %v59 = vadd.f32 %v55, %v56
  %vm60 = vcmp.gt.f32.partialorder %v57, 0.0
  %vm61 = vcmp.gt.f32.partialorder %v58, 0.0
  %vm62 = vcmp.gt.f32.partialorder %v59, 0.0
  %v63 = vmul.f32 %v57, 0.2
  %v64 = vmul.f32 %v58, 0.2
  %v65 = vmul.f32 %v59, 0.2
  %v66 = vsel %vm60, %v57, %v63
  %v67 = vsel %vm61, %v58, %v64
  %v68 = vsel %vm62, %v59, %v65
  %v69 = vadd.f32 %v66, %v33
  %v70 = vadd.f32 %v67, %v34
  %v71 = vadd.f32 %v68, %v35
  %vm72 = vcmask 64512
  %v73 = vsel %vm72, %v69, -inf
  %74 = vmax.xlane.f32.xlu0 %v73
  %v75 = vpop.xlane.xlu0 %74
  %v76 = vsel %vm72, %v70, -inf
  %77 = vmax.xlane.f32.xlu0 %v76
  %v78 = vpop.xlane.xlu0 %77
  %v79 = vsel %vm72, %v71, -inf
  %80 = vmax.xlane.f32.xlu0 %v79
  %v81 = vpop.xlane.xlu0 %80
  %v82 = vsub.f32 %v69, %v75
  %v83 = vsub.f32 %v70, %v78
  %v84 = vsub.f32 %v71, %v81
  %v85 = vmul.f32 %v82, 1.442695
  %v86 = vpow.pop %v85
  %v87 = vmul.f32 %v83, 1.442695
  %v88 = vpow.pop %v87
  %v89 = vmul.f32 %v84, 1.442695
  %v90 = vpow.pop %v89
  %v91 = vsel %vm72, %v86, 0.0
  %92 = vadd.xlane.f32.xlu0 %v91
  %v93 = vpop.xlane.xlu0 %92
  %v94 = vsel %vm72, %v88, 0.0
  %95 = vadd.xlane.f32.xlu0 %v94
  %v96 = vpop.xlane.xlu0 %95
  %v97 = vsel %vm72, %v90, 0.0
  %98 = vadd.xlane.f32.xlu0 %v97
  %v99 = vpop.xlane.xlu0 %98
  %v100 = vrcp.pop %v93
  %v101 = vrcp.pop %v96
  %v102 = vrcp.pop %v99
  %v103 = vmul.f32 %v36, %v100
  %v104 = vmul.f32 %v37, %v101
  %v105 = vmul.f32 %v38, %v102
  %107 = vset.pattern.permute.xlu0 0
  %108 = vperm.xlu0 %107, %v103
  %v109 = vpop.permute.xlu0 %108
  %112 = vset.pattern.permute.xlu0 0
  %113 = vperm.xlu0 %112, %v104
  %v114 = vpop.permute.xlu0 %113
  %117 = vset.pattern.permute.xlu0 0
  %118 = vperm.xlu0 %117, %v105
  %v119 = vpop.permute.xlu0 %118
  %v121 = vmul.f32 %v86, %v109
  %v122 = vmul.f32 %v88, %v114
  %v123 = vmul.f32 %v90, %v119
  %v124 = vpack.c.bf16 %v122, %v121
  %v125 = vpack.c.bf16 %v123, %v123
  %v126 = vpack.c.bf16 %v41, %v41
  %v127 = vperm.slane %v39, 1
  %129 = vrot.lane.b32.xlu0 %v127, 32
  %v130 = vpop.permute.xlu0 %129
  %v132 = vmul.f32 %v30, %v130
  %v133 = vmul.f32 %v31, %v130
  %v134 = vmul.f32 %v32, %v130
  %138 = vrot.lane.b32.xlu0 %v132, 96
  %v139 = vpop.permute.xlu0 %138
  %140 = vrot.lane.b32.xlu0 %v133, 96
  %v141 = vpop.permute.xlu0 %140
  %142 = vrot.lane.b32.xlu0 %v134, 96
  %v143 = vpop.permute.xlu0 %142
  %v147 = vsel %vm46, %v139, 0.0
  %148 = vadd.xlane.f32.xlu0 %v147
  %v149 = vpop.xlane.xlu0 %148
  %v150 = vsel %vm46, %v141, 0.0
  %151 = vadd.xlane.f32.xlu0 %v150
  %v152 = vpop.xlane.xlu0 %151
  %v153 = vsel %vm46, %v143, 0.0
  %154 = vadd.xlane.f32.xlu0 %v153
  %v155 = vpop.xlane.xlu0 %154
  %v156 = vperm.slane %v40, 1
  %v157 = vadd.f32 %v149, %v156
  %v158 = vadd.f32 %v152, %v156
  %v159 = vadd.f32 %v155, %v156
  %vm160 = vcmp.gt.f32.partialorder %v157, 0.0
  %vm161 = vcmp.gt.f32.partialorder %v158, 0.0
  %vm162 = vcmp.gt.f32.partialorder %v159, 0.0
  %v163 = vmul.f32 %v157, 0.2
  %v164 = vmul.f32 %v158, 0.2
  %v165 = vmul.f32 %v159, 0.2
  %v166 = vsel %vm160, %v157, %v163
  %v167 = vsel %vm161, %v158, %v164
  %v168 = vsel %vm162, %v159, %v165
  %v169 = vadd.f32 %v166, %v33
  %v170 = vadd.f32 %v167, %v34
  %v171 = vadd.f32 %v168, %v35
  %v172 = vsel %vm72, %v169, -inf
  %173 = vmax.xlane.f32.xlu0 %v172
  %v174 = vpop.xlane.xlu0 %173
  %v175 = vsel %vm72, %v170, -inf
  %176 = vmax.xlane.f32.xlu0 %v175
  %v177 = vpop.xlane.xlu0 %176
  %v178 = vsel %vm72, %v171, -inf
  %179 = vmax.xlane.f32.xlu0 %v178
  %v180 = vpop.xlane.xlu0 %179
  %v181 = vsub.f32 %v169, %v174
  %v182 = vsub.f32 %v170, %v177
  %v183 = vsub.f32 %v171, %v180
  %v184 = vmul.f32 %v181, 1.442695
  %v185 = vpow.pop %v184
  %v186 = vmul.f32 %v182, 1.442695
  %v187 = vpow.pop %v186
  %v188 = vmul.f32 %v183, 1.442695
  %v189 = vpow.pop %v188
  %v190 = vsel %vm72, %v185, 0.0
  %191 = vadd.xlane.f32.xlu0 %v190
  %v192 = vpop.xlane.xlu0 %191
  %v193 = vsel %vm72, %v187, 0.0
  %194 = vadd.xlane.f32.xlu0 %v193
  %v195 = vpop.xlane.xlu0 %194
  %v196 = vsel %vm72, %v189, 0.0
  %197 = vadd.xlane.f32.xlu0 %v196
  %v198 = vpop.xlane.xlu0 %197
  %v199 = vrcp.pop %v192
  %v200 = vrcp.pop %v195
  %v201 = vrcp.pop %v198
  %v202 = vmul.f32 %v36, %v199
  %v203 = vmul.f32 %v37, %v200
  %v204 = vmul.f32 %v38, %v201
  %206 = vset.pattern.permute.xlu0 0
  %207 = vperm.xlu0 %206, %v202
  %v208 = vpop.permute.xlu0 %207
  %211 = vset.pattern.permute.xlu0 0
  %212 = vperm.xlu0 %211, %v203
  %v213 = vpop.permute.xlu0 %212
  %216 = vset.pattern.permute.xlu0 0
  %217 = vperm.xlu0 %216, %v204
  %v218 = vpop.permute.xlu0 %217
  %v220 = vmul.f32 %v185, %v208
  %v221 = vmul.f32 %v187, %v213
  %v222 = vmul.f32 %v189, %v218
  %v223 = vpack.c.bf16 %v221, %v220
  %v224 = vpack.c.bf16 %v222, %v222
  %226 = vrot.lane.b32.xlu0 %v126, 96
  %v227 = vpop.permute.xlu0 %226
  %v229 = vsel %vm72, %v223, 0
  %v232 = vsel %vm72, %v224, 0
  %vm234 = vcmask 1043456
  %v236 = vsel %vm234, %v227, 0
  %238 = vmatpush.bf16.msra.mxu0 0
  %239 = vmatpush.bf16.msra.mxu0 0
  %240 = vmatpush.bf16.msra.mxu0 0
  %241 = vmatpush.bf16.msra.mxu0 0
  %242 = vmatpush.bf16.msra.mxu0 0
  %243 = vmatpush.bf16.msra.mxu0 0
  %244 = vmatpush.bf16.msra.mxu0 0
  %245 = vmatpush.bf16.msra.mxu0 %v236
  %246 = vmatmul.bf16.gmra.mxu0 %v229
  %v247 = vpop.f32.mrf.mxu0
  %v248 = vadd.f32 0.0, %v247
  %v249 = vpop.f32.mrf.mxu0
  %v250 = vadd.f32 0.0, %v249
  %251 = vmatmul.bf16.gmra.mxu0 %v232
  %v252 = vpop.f32.mrf.mxu0
  %v253 = vadd.f32 0.0, %v252
  %v254 = vpop.f32.mrf.mxu0
  %255 = vdwg.mxu0
  %v257 = vsel %vm72, %v124, 0
  %v260 = vsel %vm72, %v125, 0
  %v263 = vsel %vm234, %v126, 0
  %265 = vmatpush.bf16.msra.mxu0 0
  %266 = vmatpush.bf16.msra.mxu0 0
  %267 = vmatpush.bf16.msra.mxu0 0
  %268 = vmatpush.bf16.msra.mxu0 0
  %269 = vmatpush.bf16.msra.mxu0 0
  %270 = vmatpush.bf16.msra.mxu0 0
  %271 = vmatpush.bf16.msra.mxu0 0
  %272 = vmatpush.bf16.msra.mxu0 %v263
  %273 = vmatmul.bf16.gmra.mxu0 %v257
  %v274 = vpop.f32.mrf.mxu0
  %v275 = vadd.f32 %v248, %v274
  %v276 = vpop.f32.mrf.mxu0
  %v277 = vadd.f32 %v250, %v276
  %278 = vmatmul.bf16.gmra.mxu0 %v260
  %v279 = vpop.f32.mrf.mxu0
  %v280 = vadd.f32 %v253, %v279
  %v281 = vpop.f32.mrf.mxu0
  %282 = vdwg.mxu0
  %v283 = vld [vmem:[%s3] sm:$0xff]
  %v284 = vld [vmem:[%s3 + $0x8] sm:$0xff]
  %v285 = vld [vmem:[%s3 + $0x10] sm:$0xff]
  %287 = vset.pattern.permute.xlu0 0
  %288 = vperm.xlu0 %287, %v283
  %v289 = vpop.permute.xlu0 %288
  %292 = vset.pattern.permute.xlu0 0
  %293 = vperm.xlu0 %292, %v284
  %v294 = vpop.permute.xlu0 %293
  %297 = vset.pattern.permute.xlu0 0
  %298 = vperm.xlu0 %297, %v285
  %v299 = vpop.permute.xlu0 %298
  %v301 = vmul.f32 %v275, %v289
  %v302 = vmul.f32 %v277, %v294
  %v303 = vmul.f32 %v280, %v299
  %v304 = vld [vmem:[%s7] sm:$0x1]
  %v306 = vperm.slane %v304, 0
  %v308 = vadd.f32 %v301, %v306
  %v309 = vadd.f32 %v302, %v306
  %v310 = vadd.f32 %v303, %v306
  %311 = vst.msk [vmem:[%s8] sm:$0xff] %vm46, %v308
  %312 = vst.msk [vmem:[%s8 + $0x8] sm:$0xff] %vm46, %v309
  %313 = vst.msk [vmem:[%s8 + $0x10] sm:$0xff] %vm46, %v310
  // Predicated region
  $region34: #{h2_graph_convolution_forward.11} parent=0 // pred_check
    _
  $region35: #{h2_graph_convolution_forward.11} parent=0 // pred_check_branch
    %315 = sbr.rel (0) target = $region37
  $region36: #{h2_graph_convolution_forward.11} parent=0 // pred_region
    _
  $region37: #{h2_graph_convolution_forward.11} parent=0 // pred_fallthru
    _
  // Predicated region
  $region38: #{h2_graph_convolution_forward.11} parent=0 // pred_check
    _
  $region39: #{h2_graph_convolution_forward.11} parent=0 // pred_check_branch
    %317 = sbr.rel (0) target = $region41
  $region40: #{h2_graph_convolution_forward.11} parent=0 // pred_region
    _
  $region41: #{h2_graph_convolution_forward.11} parent=0 // pred_fallthru
    _

// kernel: h2_graph_convolution_forward.15
$region0: #{h2_graph_convolution_forward.15}
  #allocation0 [shape = 'u32[]', space=smem, size = 0x4, offset = 0x4, fixed_abs, tag = 'smem constant byte address 0x4 - core index']
  #allocation1 [shape = 'u32[72,128]{1,0:T(1,128)}', space=vmem, size = 0x9000, scoped, tag = 'internal scratch']
  %s0 = inlined_call_operand.vmem [shape: f32[24,32], index: 0, kind: input, shape index: {}]
  %s1 = inlined_call_operand.vmem [shape: f32[24,32], index: 1, kind: input, shape index: {}]
  %s2 = inlined_call_operand.vmem [shape: f32[24,32], index: 2, kind: input, shape index: {}]
  %s3 = inlined_call_operand.hbm [shape: f32[24,32], index: 3, kind: output, shape index: {}]
  %s4 = sld [smem:[#allocation0]]
  $region22: #{h2_graph_convolution_forward.15} parent=0
    _
  %s6 = ssub.s32 1, %s4
  %s7 = scalar_select 0, %s6, %s4
  $region1: #{h2_graph_convolution_forward.15} parent=0
    #allocation2 [shape = 'u8[12288]{0}', space=vmem, size = 0x3000, scoped, tag = 'output window, operand 0, single buffered']
    #allocation3 [shape = 's32[1]{0}', space=sflag, size = 0x4, scoped, tag = 'scoped memory for h2_graph_convolution_forward.15']
    %8 = vsyncpa [#allocation3], 0
    // Predicated region
    $region2: #{h2_graph_convolution_forward.15} parent=1 // pred_check
      _
    $region3: #{h2_graph_convolution_forward.15} parent=1 // pred_check_branch
      %10 = sbr.rel (0) target = $region5
    $region4: #{h2_graph_convolution_forward.15} parent=1 // pred_region
      _
    $region5: #{h2_graph_convolution_forward.15} parent=1 // pred_fallthru
      _
    // Predicated region
    $region6: #{h2_graph_convolution_forward.15} parent=1 // pred_check
      _
    $region7: #{h2_graph_convolution_forward.15} parent=1 // pred_check_branch
      %12 = sbr.rel (0) target = $region9
    $region8: #{h2_graph_convolution_forward.15} parent=1 // pred_region
      _
    $region9: #{h2_graph_convolution_forward.15} parent=1 // pred_fallthru
      _
    // Predicated region
    $region10: #{h2_graph_convolution_forward.15} parent=1 // pred_check
      _
    $region11: #{h2_graph_convolution_forward.15} parent=1 // pred_check_branch
      %14 = sbr.rel (0) target = $region13
    $region12: #{h2_graph_convolution_forward.15} parent=1 // pred_region
      _
    $region13: #{h2_graph_convolution_forward.15} parent=1 // pred_fallthru
      _
    %v15 = vld [vmem:[%s0] sm:$0xff]
    %v16 = vld [vmem:[%s0 + $0x8] sm:$0xff]
    %v17 = vld [vmem:[%s0 + $0x10] sm:$0xff]
    %v18 = vld [vmem:[%s1] sm:$0xff]
    %v19 = vld [vmem:[%s1 + $0x8] sm:$0xff]
    %v20 = vld [vmem:[%s1 + $0x10] sm:$0xff]
    %v21 = vadd.f32 %v15, %v18
    %v22 = vadd.f32 %v16, %v19
    %v23 = vadd.f32 %v17, %v20
    %v24 = vld [vmem:[%s2] sm:$0xff]
    %v25 = vld [vmem:[%s2 + $0x8] sm:$0xff]
    %v26 = vld [vmem:[%s2 + $0x10] sm:$0xff]
    %v27 = vadd.f32 %v21, %v24
    %v28 = vadd.f32 %v22, %v25
    %v29 = vadd.f32 %v23, %v26
    %v30 = vmul.f32 %v27, 0.33333334
    %v31 = vmul.f32 %v28, 0.33333334
    %v32 = vmul.f32 %v29, 0.33333334
    %v33 = vmul.f32 %v30, %v30
    %v34 = vmul.f32 %v31, %v31
    %v35 = vmul.f32 %v32, %v32
    %vm36 = vcmask 261120
    %v37 = vsel %vm36, %v33, 0.0
    %38 = vadd.xlane.f32.xlu0 %v37
    %v39 = vpop.xlane.xlu0 %38
    %v40 = vsel %vm36, %v34, 0.0
    %41 = vadd.xlane.f32.xlu0 %v40
    %v42 = vpop.xlane.xlu0 %41
    %v43 = vsel %vm36, %v35, 0.0
    %44 = vadd.xlane.f32.xlu0 %v43
    %v45 = vpop.xlane.xlu0 %44
    %v46 = vrsqrt.pop %v39
    %v47 = vmul.f32 %v46, %v39
    %v48 = vmul.f32 %v47, %v46
    %v49 = vmul.f32 0.5, %v48
    %v50 = vsub.f32 1.5, %v49
    %v51 = vmul.f32 %v46, %v50
    %v52 = vmul.f32 %v39, %v51
    %vm53 = vcmp.eq.f32.partialorder %v39, inf
    %v54 = vsel %vm53, %v39, %v52
    %vm55 = vcmp.eq.f32.partialorder %v39, 0.0
    %v56 = vand.u32 %v39, 2147483648
    %v57 = vsel %vm55, %v56, %v54
    %v58 = vrsqrt.pop %v42
    %v59 = vmul.f32 %v58, %v42
    %v60 = vmul.f32 %v59, %v58
    %v61 = vmul.f32 0.5, %v60
    %v62 = vsub.f32 1.5, %v61
    %v63 = vmul.f32 %v58, %v62
    %v64 = vmul.f32 %v42, %v63
    %vm65 = vcmp.eq.f32.partialorder %v42, inf
    %v66 = vsel %vm65, %v42, %v64
    %vm67 = vcmp.eq.f32.partialorder %v42, 0.0
    %v68 = vand.u32 %v42, 2147483648
    %v69 = vsel %vm67, %v68, %v66
    %v70 = vrsqrt.pop %v45
    %v71 = vmul.f32 %v70, %v45
    %v72 = vmul.f32 %v71, %v70
    %v73 = vmul.f32 0.5, %v72
    %v74 = vsub.f32 1.5, %v73
    %v75 = vmul.f32 %v70, %v74
    %v76 = vmul.f32 %v45, %v75
    %vm77 = vcmp.eq.f32.partialorder %v45, inf
    %v78 = vsel %vm77, %v45, %v76
    %vm79 = vcmp.eq.f32.partialorder %v45, 0.0
    %v80 = vand.u32 %v45, 2147483648
    %v81 = vsel %vm79, %v80, %v78
    %v82 = vmax.f32 %v57, 1e-15
    %v83 = vmax.f32 %v69, 1e-15
    %v84 = vmax.f32 %v81, 1e-15
    %v85 = vtanh.pop %v82
    %v86 = vtanh.pop %v83
    %v87 = vtanh.pop %v84
    %v88 = vmul.f32 %v85, %v30
    %v89 = vmul.f32 %v86, %v31
    %v90 = vmul.f32 %v87, %v32
    %v91 = vrcp.pop %v82
    %v92 = vmul.f32 %v82, %v91
    %v93 = vsub.f32 1.0, %v92
    %v94 = vmul.f32 %v91, %v93
    %v95 = vadd.f32 %v91, %v94
    %vm96 = vweird.f32 %v82
    %vm97 = vweird.f32 %v91
    %vm98 = vmor %vm96, %vm97
    %v99 = vsel %vm98, %v91, %v95
    %v100 = vand.u32 2147483647, %v82
    %vm101 = vcmp.eq.f32.partialorder %v100, 8.507059e+37
    %v102 = vand.u32 %v82, 2147483648
    %v103 = vor.u32 1.1754944e-38, %v102
    %v104 = vsel %vm101, %v103, %v99
    %v105 = vmul.f32 %v88, %v104
    %v106 = vrcp.pop %v83
    %v107 = vmul.f32 %v83, %v106
    %v108 = vsub.f32 1.0, %v107
    %v109 = vmul.f32 %v106, %v108
    %v110 = vadd.f32 %v106, %v109
    %vm111 = vweird.f32 %v83
    %vm112 = vweird.f32 %v106
    %vm113 = vmor %vm111, %vm112
    %v114 = vsel %vm113, %v106, %v110
    %v115 = vand.u32 2147483647, %v83
    %vm116 = vcmp.eq.f32.partialorder %v115, 8.507059e+37
    %v117 = vand.u32 %v83, 2147483648
    %v118 = vor.u32 1.1754944e-38, %v117
    %v119 = vsel %vm116, %v118, %v114
    %v120 = vmul.f32 %v89, %v119
    %v121 = vrcp.pop %v84
    %v122 = vmul.f32 %v84, %v121
    %v123 = vsub.f32 1.0, %v122
    %v124 = vmul.f32 %v121, %v123
    %v125 = vadd.f32 %v121, %v124
    %vm126 = vweird.f32 %v84
    %vm127 = vweird.f32 %v121
    %vm128 = vmor %vm126, %vm127
    %v129 = vsel %vm128, %v121, %v125
    %v130 = vand.u32 2147483647, %v84
    %vm131 = vcmp.eq.f32.partialorder %v130, 8.507059e+37
    %v132 = vand.u32 %v84, 2147483648
    %v133 = vor.u32 1.1754944e-38, %v132
    %v134 = vsel %vm131, %v133, %v129
    %v135 = vmul.f32 %v90, %v134
    %v136 = vmul.f32 %v105, %v105
    %v137 = vmul.f32 %v120, %v120
    %v138 = vmul.f32 %v135, %v135
    %v139 = vsel %vm36, %v136, 0.0
    %140 = vadd.xlane.f32.xlu0 %v139
    %v141 = vpop.xlane.xlu0 %140
    %v142 = vsel %vm36, %v137, 0.0
    %143 = vadd.xlane.f32.xlu0 %v142
    %v144 = vpop.xlane.xlu0 %143
    %v145 = vsel %vm36, %v138, 0.0
    %146 = vadd.xlane.f32.xlu0 %v145
    %v147 = vpop.xlane.xlu0 %146
    %v148 = vrsqrt.pop %v141
    %v149 = vmul.f32 %v148, %v141
    %v150 = vmul.f32 %v149, %v148
    %v151 = vmul.f32 0.5, %v150
    %v152 = vsub.f32 1.5, %v151
    %v153 = vmul.f32 %v148, %v152
    %v154 = vmul.f32 %v141, %v153
    %vm155 = vcmp.eq.f32.partialorder %v141, inf
    %v156 = vsel %vm155, %v141, %v154
    %vm157 = vcmp.eq.f32.partialorder %v141, 0.0
    %v158 = vand.u32 %v141, 2147483648
    %v159 = vsel %vm157, %v158, %v156
    %v160 = vrsqrt.pop %v144
    %v161 = vmul.f32 %v160, %v144
    %v162 = vmul.f32 %v161, %v160
    %v163 = vmul.f32 0.5, %v162
    %v164 = vsub.f32 1.5, %v163
    %v165 = vmul.f32 %v160, %v164
    %v166 = vmul.f32 %v144, %v165
    %vm167 = vcmp.eq.f32.partialorder %v144, inf
    %v168 = vsel %vm167, %v144, %v166
    %vm169 = vcmp.eq.f32.partialorder %v144, 0.0
    %v170 = vand.u32 %v144, 2147483648
    %v171 = vsel %vm169, %v170, %v168
    %v172 = vrsqrt.pop %v147
    %v173 = vmul.f32 %v172, %v147
    %v174 = vmul.f32 %v173, %v172
    %v175 = vmul.f32 0.5, %v174
    %v176 = vsub.f32 1.5, %v175
    %v177 = vmul.f32 %v172, %v176
    %v178 = vmul.f32 %v147, %v177
    %vm179 = vcmp.eq.f32.partialorder %v147, inf
    %v180 = vsel %vm179, %v147, %v178
    %vm181 = vcmp.eq.f32.partialorder %v147, 0.0
    %v182 = vand.u32 %v147, 2147483648
    %v183 = vsel %vm181, %v182, %v180
    %v184 = vmax.f32 %v159, 1e-15
    %v185 = vmax.f32 %v171, 1e-15
    %v186 = vmax.f32 %v183, 1e-15
    %vm187 = vcmp.gt.f32.partialorder %v184, 0.996
    %vm188 = vcmp.gt.f32.partialorder %v185, 0.996
    %vm189 = vcmp.gt.f32.partialorder %v186, 0.996
    %v190 = vrcp.pop %v184
    %v191 = vmul.f32 %v184, %v190
    %v192 = vsub.f32 1.0, %v191
    %v193 = vmul.f32 %v190, %v192
    %v194 = vadd.f32 %v190, %v193
    %vm195 = vweird.f32 %v184
    %vm196 = vweird.f32 %v190
    %vm197 = vmor %vm195, %vm196
    %v198 = vsel %vm197, %v190, %v194
    %v199 = vand.u32 2147483647, %v184
    %vm200 = vcmp.eq.f32.partialorder %v199, 8.507059e+37
    %v201 = vand.u32 %v184, 2147483648
    %v202 = vor.u32 1.1754944e-38, %v201
    %v203 = vsel %vm200, %v202, %v198
    %v204 = vmul.f32 %v105, %v203
    %v205 = vrcp.pop %v185
    %v206 = vmul.f32 %v185, %v205
    %v207 = vsub.f32 1.0, %v206
    %v208 = vmul.f32 %v205, %v207
    %v209 = vadd.f32 %v205, %v208
    %vm210 = vweird.f32 %v185
    %vm211 = vweird.f32 %v205
    %vm212 = vmor %vm210, %vm211
    %v213 = vsel %vm212, %v205, %v209
    %v214 = vand.u32 2147483647, %v185
    %vm215 = vcmp.eq.f32.partialorder %v214, 8.507059e+37
    %v216 = vand.u32 %v185, 2147483648
    %v217 = vor.u32 1.1754944e-38, %v216
    %v218 = vsel %vm215, %v217, %v213
    %v219 = vmul.f32 %v120, %v218
    %v220 = vrcp.pop %v186
    %v221 = vmul.f32 %v186, %v220
    %v222 = vsub.f32 1.0, %v221
    %v223 = vmul.f32 %v220, %v222
    %v224 = vadd.f32 %v220, %v223
    %vm225 = vweird.f32 %v186
    %vm226 = vweird.f32 %v220
    %vm227 = vmor %vm225, %vm226
    %v228 = vsel %vm227, %v220, %v224
    %v229 = vand.u32 2147483647, %v186
    %vm230 = vcmp.eq.f32.partialorder %v229, 8.507059e+37
    %v231 = vand.u32 %v186, 2147483648
    %v232 = vor.u32 1.1754944e-38, %v231
    %v233 = vsel %vm230, %v232, %v228
    %v234 = vmul.f32 %v135, %v233
    %v235 = vmul.f32 %v204, 0.996
    %v236 = vmul.f32 %v219, 0.996
    %v237 = vmul.f32 %v234, 0.996
    %v238 = vsel %vm187, 1, 0
    %v239 = vsel %vm188, 1, 0
    %v240 = vsel %vm189, 1, 0
    %vm241 = vcmp.eq.s32.totalorder %v238, 1
    %vm242 = vcmp.eq.s32.totalorder %v239, 1
    %vm243 = vcmp.eq.s32.totalorder %v240, 1
    %v244 = vsel %vm241, %v235, %v105
    %v245 = vsel %vm242, %v236, %v120
    %v246 = vsel %vm243, %v237, %v135
    %247 = vst.msk [vmem:[#allocation2] sm:$0xff] %vm36, %v244
    %248 = vst.msk [vmem:[#allocation2 + $0x8] sm:$0xff] %vm36, %v245
    %249 = vst.msk [vmem:[#allocation2 + $0x10] sm:$0xff] %vm36, %v246
    // Predicated region
    $region14: #{h2_graph_convolution_forward.15} parent=1 // pred_check
      _
    $region15: #{h2_graph_convolution_forward.15} parent=1 // pred_check_branch
      %251 = sbr.rel (0) target = $region17
    $region16: #{h2_graph_convolution_forward.15} parent=1 // pred_region
      %253 = vsyncadd [#allocation3], 0
      %s254 = sshll.u32 [#allocation2], 4
      %s255 = int_to_ptr.vmem [resolvable:$true] %s254
      %s256 = sshll.u32 %s3, 4
      %s257 = int_to_ptr.hbm [resolvable:$true] %s256
      %262 = dma.vmem_to_hbm [thread:$0]  %s255, 384, %s257, [#allocation3], 128, 128, 8
    $region17: #{h2_graph_convolution_forward.15} parent=1 // pred_fallthru
      _
    // Predicated region
    $region18: #{h2_graph_convolution_forward.15} parent=1 // pred_check
      _
    $region19: #{h2_graph_convolution_forward.15} parent=1 // pred_check_branch
      %264 = sbr.rel (0) target = $region21
    $region20: #{h2_graph_convolution_forward.15} parent=1 // pred_region
      %266 = dma.done [#allocation3], 384
    $region21: #{h2_graph_convolution_forward.15} parent=1 // pred_fallthru
      _
    %267 = vsyncpa [#allocation3], 1

</llo_original>
